<compile_context>
chip_gen: v7x
topology: tpu7x:2x2x1
jax: 0.10.0
libtpu: 0.0.40
codegen_flags: <defaults>
</compile_context>

<pallas_src>
import functools

import jax
import jax.numpy as jnp
from jax.experimental import pallas as pl
from jax.experimental.pallas import tpu as pltpu

KH = KW = 5
PAD = 2


def _residual_block_kernel(*refs, BB: int, H: int, S: int, identity_skip: bool):
    """Fused ResidualBlock forward for one block of BB samples.

    x_ref   : (BB, H, W*Cin)       unpadded input block, lane-flattened (w, ci)
    t1_ref  : (KH, W*Cin,  W*Cout) conv1 Toeplitz weights, bf16 (W padding baked in)
    b1_ref  : (1, W*Cout)          conv1 bias (f32), tiled over W
    t2_ref  : (KH, W*Cout, W*Cout) conv2 Toeplitz weights, bf16
    bout_ref: (1, W*Cout)          conv2 bias + skip bias (f32), tiled over W
    tsk_ref : (W*Cin, W*Cout)      block-diagonal 1x1 skip weights, bf16 (proj case only)
    o_ref   : (BB, H, W*Cout)
    xp_ref  : VMEM (BB*S, W*Cin)   bf16 per-sample H-padded input scratch
    hp_ref  : VMEM (BB*S, W*Cout)  bf16 per-sample H-padded relu(conv1) scratch
    """
    if identity_skip:
        x_ref, t1_ref, b1_ref, t2_ref, bout_ref, o_ref, xp_ref, hp_ref = refs
        tsk_ref = None
    else:
        x_ref, t1_ref, b1_ref, t2_ref, bout_ref, tsk_ref, o_ref, xp_ref, hp_ref = refs

    # Rows of the padded row-space we actually need (covers every harvested row).
    Mo = (BB - 1) * S + H

    # Zero the per-sample halo / tail rows ONCE: the scratch persists across grid
    # steps and the interior writes below never touch those rows.
    @pl.when(pl.program_id(0) == 0)
    def _init_halos():
        xp_ref[...] = jnp.zeros(xp_ref.shape, xp_ref.dtype)
        hp_ref[...] = jnp.zeros(hp_ref.shape, hp_ref.dtype)

    # Scatter the BB samples into the H-padded layout; cast to bf16 MXU operands once.
    for b in range(BB):
        xp_ref[b * S + PAD:b * S + PAD + H, :] = x_ref[b].astype(jnp.bfloat16)

    # ---- conv1: 5 per-kh GEMMs, M = Mo, K = W*Cin, N = W*Cout, f32 accumulation ----
    acc1 = jnp.dot(xp_ref[0:Mo, :], t1_ref[0], preferred_element_type=jnp.float32)
    for kh in range(1, KH):
        acc1 = acc1 + jnp.dot(xp_ref[kh:kh + Mo, :], t1_ref[kh],
                              preferred_element_type=jnp.float32)
    h1 = jnp.maximum(acc1 + b1_ref[...], 0.0)            # f32 bias + ReLU on VPU

    # Stash relu(conv1) interiors back into the padded scratch (bf16).
    for b in range(BB):
        hp_ref[b * S + PAD:b * S + PAD + H, :] = \
            h1[b * S:b * S + H, :].astype(jnp.bfloat16)

    # ---- conv2: 5 per-kh GEMMs, K = N = W*Cout -------------------------------------
    acc2 = jnp.dot(hp_ref[0:Mo, :], t2_ref[0], preferred_element_type=jnp.float32)
    for kh in range(1, KH):
        acc2 = acc2 + jnp.dot(hp_ref[kh:kh + Mo, :], t2_ref[kh],
                              preferred_element_type=jnp.float32)

    # ---- 1x1 projection skip: one GEMM in the same padded-row indexing as acc2 -----
    if not identity_skip:
        acc2 = acc2 + jnp.dot(xp_ref[PAD:PAD + Mo, :], tsk_ref[...],
                              preferred_element_type=jnp.float32)

    out = acc2 + bout_ref[...]                           # conv2 bias + skip bias fused

    # Harvest per-sample output rows; b*S is a multiple of 8 -> aligned slices.
    for b in range(BB):
        res = out[b * S:b * S + H, :]
        if identity_skip:
            res = res + x_ref[b]                         # exact f32 identity skip
        o_ref[b] = res.astype(o_ref.dtype)


def _toeplitz_weights(w_oihw, width):
    """Pack OIHW 5x5 conv weights into per-kh Toeplitz GEMM matrices.

    Returns T of shape (KH, width*Cin, width*Cout) with
      T[kh, p*Cin+ci, q*Cout+co] = w[co, ci, kh, p - q + PAD]   (zero if tap invalid)
    so that out_row(h) = sum_kh x_padH_row(h + kh) @ T[kh] implements the 'same'
    conv, with the W-direction zero padding folded into T.
    """
    Cout, Cin, kh_, kw_ = w_oihw.shape
    w_k = jnp.transpose(w_oihw, (2, 3, 1, 0))             # (KH, KW, Cin, Cout)
    p = jnp.arange(width)[:, None]                        # input column
    q = jnp.arange(width)[None, :]                        # output column
    kw_idx = p - q + PAD                                  # tap index per (p, q)
    valid = (kw_idx >= 0) & (kw_idx < kw_)
    kw_c = jnp.clip(kw_idx, 0, kw_ - 1)
    T = w_k[:, kw_c, :, :]                                # (KH, W, W, Cin, Cout)
    T = T * valid[None, :, :, None, None].astype(w_k.dtype)
    T = jnp.transpose(T, (0, 1, 3, 2, 4))                 # (KH, W, Cin, W, Cout)
    return T.reshape(kh_, width * Cin, width * Cout)


def _skip_weights(wsk, width):
    """Block-diagonal GEMM matrix for the 1x1 skip conv in the (W*C) layout."""
    Cout, Cin = wsk.shape
    eye = jnp.eye(width, dtype=wsk.dtype)
    T = eye[:, None, :, None] * jnp.transpose(wsk)[None, :, None, :]
    return T.reshape(width * Cin, width * Cout)           # (W*Cin, W*Cout)


def _pick_batch_block(B, H, S, target_rows=256):
    """Largest divisor of B whose batch-blocked GEMM M = (BB-1)*S + H stays <= 256."""
    bb = 1
    for d in range(1, B + 1):
        if B % d == 0 and (d - 1) * S + H <= target_rows:
            bb = d
    return bb


def make_residual_block(w1, b1, w2, b2, wsk, bsk, H, W):
    """Pack weights ONCE (outside the per-call path) and return a jitted forward.

    w1/w2 in PyTorch OIHW; skip weight as (Cout, Cin); x is NCHW at call time.
    """
    Cout, Cin = int(w1.shape[0]), int(w1.shape[1])
    identity_skip = (Cin == Cout)                          # nn.Identity() skip case
    WCin, WCout = W * Cin, W * Cout
    S = -(-(H + 2 * PAD) // 8) * 8                         # padded per-sample row stride

    # ---- one-time weight packing (bf16 MXU operands, f32 biases) -------------------
    t1 = _toeplitz_weights(w1, W).astype(jnp.bfloat16)     # (KH, W*Cin,  W*Cout)
    t2 = _toeplitz_weights(w2, W).astype(jnp.bfloat16)     # (KH, W*Cout, W*Cout)
    b1_t = jnp.tile(b1, W)[None, :].astype(jnp.float32)    # (1, W*Cout)
    bout_t = jnp.tile(b2 + bsk, W)[None, :].astype(jnp.float32)
    tsk = None if identity_skip else _skip_weights(wsk, W).astype(jnp.bfloat16)

    @jax.jit
    def forward(x_nchw):
        B = x_nchw.shape[0]
        assert x_nchw.shape == (B, Cin, H, W)
        BB = _pick_batch_block(B, H, S)
        n_steps = B // BB
        Mo = (BB - 1) * S + H

        # NCHW -> NHWC -> lane-flatten (W, C); H padding is done in-kernel.
        x = jnp.transpose(x_nchw, (0, 2, 3, 1)).reshape(B, H, WCin)

        in_specs = [
            pl.BlockSpec((BB, H, WCin), lambda i: (i, 0, 0)),
            pl.BlockSpec((KH, WCin, WCout), lambda i: (0, 0, 0)),
            pl.BlockSpec((1, WCout), lambda i: (0, 0)),
            pl.BlockSpec((KH, WCout, WCout), lambda i: (0, 0, 0)),
            pl.BlockSpec((1, WCout), lambda i: (0, 0)),
        ]
        args = [x, t1, b1_t, t2, bout_t]
        if not identity_skip:
            in_specs.append(pl.BlockSpec((WCin, WCout), lambda i: (0, 0)))
            args.append(tsk)

        flops = 2 * n_steps * Mo * (KH * WCin * WCout + KH * WCout * WCout
                                    + (0 if identity_skip else WCin * WCout))
        bytes_accessed = (B * H * WCin * 4 + B * H * WCout * 4
                          + 2 * (t1.size + t2.size
                                 + (0 if identity_skip else tsk.size))
                          + 4 * (b1_t.size + bout_t.size))

        kernel = functools.partial(_residual_block_kernel, BB=BB, H=H, S=S,
                                   identity_skip=identity_skip)

        out_flat = pl.pallas_call(
            kernel,
            out_shape=jax.ShapeDtypeStruct((B, H, WCout), x_nchw.dtype),
            grid=(n_steps,),
            in_specs=in_specs,
            out_specs=pl.BlockSpec((BB, H, WCout), lambda i: (i, 0, 0)),
            scratch_shapes=[pltpu.VMEM((BB * S, WCin), jnp.bfloat16),
                            pltpu.VMEM((BB * S, WCout), jnp.bfloat16)],
            compiler_params=pltpu.CompilerParams(
                dimension_semantics=("parallel",),
                vmem_limit_bytes=32 * 1024 * 1024),
            cost_estimate=pl.CostEstimate(flops=flops, transcendentals=0,
                                          bytes_accessed=bytes_accessed),
        )(*args)

        out = out_flat.reshape(B, H, W, Cout)
        return jnp.transpose(out, (0, 3, 1, 2))            # back to NCHW

    return forward


def ref_residual_block(x, w1, b1, w2, b2, wsk, bsk):
    """Pure-JAX NCHW reference (mirrors the PyTorch module)."""
    dn = ('NCHW', 'OIHW', 'NCHW')
    hi = jax.lax.Precision.HIGHEST

    def conv(x, w, b, pad):
        y = jax.lax.conv_general_dilated(x, w, (1, 1), [(pad, pad), (pad, pad)],
                                         dimension_numbers=dn, precision=hi)
        return y + b[None, :, None, None]

    residual = conv(x, wsk[:, :, None, None], bsk, 0)      # 1x1 conv needs 4-D weights
    h = jax.nn.relu(conv(x, w1, b1, 2))
    return conv(h, w2, b2, 2) + residual


def init_params(key, in_channels, out_channels):
    """Deterministic PyTorch-style (kaiming-uniform-ish) init."""
    k1, k2, k3, k4, k5, k6 = jax.random.split(key, 6)
    bnd1 = 1.0 / jnp.sqrt(in_channels * KH * KW)
    bnd2 = 1.0 / jnp.sqrt(out_channels * KH * KW)
    bnds = 1.0 / jnp.sqrt(in_channels)
    w1 = jax.random.uniform(k1, (out_channels, in_channels, KH, KW),
                            jnp.float32, -bnd1, bnd1)
    b1 = jax.random.uniform(k2, (out_channels,), jnp.float32, -bnd1, bnd1)
    w2 = jax.random.uniform(k3, (out_channels, out_channels, KH, KW),
                            jnp.float32, -bnd2, bnd2)
    b2 = jax.random.uniform(k4, (out_channels,), jnp.float32, -bnd2, bnd2)
    if in_channels != out_channels:
        wsk = jax.random.uniform(k5, (out_channels, in_channels),
                                 jnp.float32, -bnds, bnds)
        bsk = jax.random.uniform(k6, (out_channels,), jnp.float32, -bnds, bnds)
    else:
        # nn.Identity() skip: identity 1x1 conv with zero bias reproduces it exactly.
        wsk = jnp.eye(out_channels, dtype=jnp.float32)
        bsk = jnp.zeros((out_channels,), jnp.float32)
    return w1, b1, w2, b2, wsk, bsk


if __name__ == "__main__":
    B, Cin, Cout, H, W = 2, 4, 8, 16, 16

    key = jax.random.PRNGKey(0)
    kx, kp = jax.random.split(key)

    # --- projection-skip case (Cin != Cout) -----------------------------------------
    x = jax.random.normal(kx, (B, Cin, H, W), jnp.float32)
    params = init_params(kp, Cin, Cout)
    fwd = make_residual_block(*params, H, W)               # packs weights once
    out = jax.block_until_ready(fwd(x))
    ref = ref_residual_block(x, *params)
    assert out.shape == (B, Cout, H, W)
    # bf16 MXU operands with f32 accumulation -> allow bf16-level rounding.
    assert jnp.allclose(out, ref, rtol=2e-2, atol=2e-2), \
        f"max abs err {jnp.max(jnp.abs(out - ref))}"

    # --- identity-skip case (Cin == Cout): skip GEMM statically elided ----------------
    x2 = jax.random.normal(kx, (B, Cout, H, W), jnp.float32)
    params2 = init_params(kp, Cout, Cout)
    fwd2 = make_residual_block(*params2, H, W)
    out2 = jax.block_until_ready(fwd2(x2))
    ref2 = ref_residual_block(x2, *params2)
    assert out2.shape == (B, Cout, H, W)
    assert jnp.allclose(out2, ref2, rtol=2e-2, atol=2e-2), \
        f"max abs err {jnp.max(jnp.abs(out2 - ref2))}"

    print("KERNEL_OK")
</pallas_src>

<mosaic_0001>
module attributes {stable_mosaic.version = 11 : i64} {
  func.func @_residual_block_kernel(%arg0: i32, %arg1: memref<2x16x64xf32, #tpu.memory_space<vmem>>, %arg2: memref<5x64x128xbf16, #tpu.memory_space<vmem>>, %arg3: memref<1x128xf32, #tpu.memory_space<vmem>>, %arg4: memref<5x128x128xbf16, #tpu.memory_space<vmem>>, %arg5: memref<1x128xf32, #tpu.memory_space<vmem>>, %arg6: memref<64x128xbf16, #tpu.memory_space<vmem>>, %arg7: memref<2x16x128xf32, #tpu.memory_space<vmem>>, %arg8: memref<48x64xbf16, #tpu.memory_space<vmem>>, %arg9: memref<48x128xbf16, #tpu.memory_space<vmem>>) attributes {dimension_semantics = [#tpu.dimension_semantics<parallel>], iteration_bounds = array<i64: 1>, scalar_prefetch = 0 : i64, scratch_operands = 2 : i64, tpu.core_type = #tpu.core_type<tc>, window_params = [{transform_indices = @transform_0, window_bounds = array<i64: 2, 16, 64>}, {pipeline_mode = #tpu.pipeline_mode<synchronous>, transform_indices = @transform_1, window_bounds = array<i64: 5, 64, 128>}, {pipeline_mode = #tpu.pipeline_mode<synchronous>, transform_indices = @transform_2, window_bounds = array<i64: 1, 128>}, {pipeline_mode = #tpu.pipeline_mode<synchronous>, transform_indices = @transform_3, window_bounds = array<i64: 5, 128, 128>}, {pipeline_mode = #tpu.pipeline_mode<synchronous>, transform_indices = @transform_4, window_bounds = array<i64: 1, 128>}, {pipeline_mode = #tpu.pipeline_mode<synchronous>, transform_indices = @transform_5, window_bounds = array<i64: 64, 128>}, {transform_indices = @transform_6, window_bounds = array<i64: 2, 16, 128>}]} {
    %c0_i32 = arith.constant 0 : i32
    %0 = arith.cmpi eq, %arg0, %c0_i32 : i32
    %1 = arith.extui %0 : i1 to i32
    %c0_i32_0 = arith.constant 0 : i32
    %2 = arith.cmpi ne, %1, %c0_i32_0 : i32
    scf.if %2 {
      %cst_84 = arith.constant 0.000000e+00 : bf16
      %85 = vector.broadcast %cst_84 : bf16 to vector<48x64xbf16>
      %c0_85 = arith.constant 0 : index
      %c0_86 = arith.constant 0 : index
      %86 = vector.load %arg8[%c0_85, %c0_86] : memref<48x64xbf16, #tpu.memory_space<vmem>>, vector<48x64xbf16>
      tpu.vector_store %arg8[%c0_85, %c0_86], %85 {strides = array<i32>} : memref<48x64xbf16, #tpu.memory_space<vmem>>, vector<48x64xbf16>,
      %cst_87 = arith.constant 0.000000e+00 : bf16
      %87 = vector.broadcast %cst_87 : bf16 to vector<48x128xbf16>
      %c0_88 = arith.constant 0 : index
      %c0_89 = arith.constant 0 : index
      %88 = vector.load %arg9[%c0_88, %c0_89] : memref<48x128xbf16, #tpu.memory_space<vmem>>, vector<48x128xbf16>
      tpu.vector_store %arg9[%c0_88, %c0_89], %87 {strides = array<i32>} : memref<48x128xbf16, #tpu.memory_space<vmem>>, vector<48x128xbf16>,
    } else {
    }
    %c0 = arith.constant 0 : index
    %c0_1 = arith.constant 0 : index
    %c0_2 = arith.constant 0 : index
    %3 = vector.load %arg1[%c0, %c0_1, %c0_2] : memref<2x16x64xf32, #tpu.memory_space<vmem>>, vector<1x16x64xf32>
    %4 = vector.shape_cast %3 : vector<1x16x64xf32> to vector<16x64xf32>
    %5 = arith.truncf %4 : vector<16x64xf32> to vector<16x64xbf16>
    %c2 = arith.constant 2 : index
    %c0_3 = arith.constant 0 : index
    %6 = vector.load %arg8[%c2, %c0_3] : memref<48x64xbf16, #tpu.memory_space<vmem>>, vector<16x64xbf16>
    tpu.vector_store %arg8[%c2, %c0_3], %5 {strides = array<i32>} : memref<48x64xbf16, #tpu.memory_space<vmem>>, vector<16x64xbf16>,
    %c1 = arith.constant 1 : index
    %c0_4 = arith.constant 0 : index
    %c0_5 = arith.constant 0 : index
    %7 = vector.load %arg1[%c1, %c0_4, %c0_5] : memref<2x16x64xf32, #tpu.memory_space<vmem>>, vector<1x16x64xf32>
    %8 = vector.shape_cast %7 : vector<1x16x64xf32> to vector<16x64xf32>
    %9 = arith.truncf %8 : vector<16x64xf32> to vector<16x64xbf16>
    %c26 = arith.constant 26 : index
    %c0_6 = arith.constant 0 : index
    %10 = vector.load %arg8[%c26, %c0_6] : memref<48x64xbf16, #tpu.memory_space<vmem>>, vector<16x64xbf16>
    tpu.vector_store %arg8[%c26, %c0_6], %9 {strides = array<i32>} : memref<48x64xbf16, #tpu.memory_space<vmem>>, vector<16x64xbf16>,
    %c0_7 = arith.constant 0 : index
    %c0_8 = arith.constant 0 : index
    %11 = vector.load %arg8[%c0_7, %c0_8] : memref<48x64xbf16, #tpu.memory_space<vmem>>, vector<40x64xbf16>
    %c0_9 = arith.constant 0 : index
    %c0_10 = arith.constant 0 : index
    %c0_11 = arith.constant 0 : index
    %12 = vector.load %arg2[%c0_9, %c0_10, %c0_11] : memref<5x64x128xbf16, #tpu.memory_space<vmem>>, vector<1x64x128xbf16>
    %13 = vector.shape_cast %12 : vector<1x64x128xbf16> to vector<64x128xbf16>
    %cst = arith.constant dense<0.000000e+00> : vector<40x128xf32>
    %14 = tpu.matmul %11, %13, %cst {dimension_numbers = #tpu.dot_dimension_numbers<[1], [0], [0], [1], [0, 0, 1, 1], [], []>} : vector<40x64xbf16>, vector<64x128xbf16>, vector<40x128xf32> -> vector<40x128xf32>
    %c1_12 = arith.constant 1 : index
    %c0_13 = arith.constant 0 : index
    %15 = vector.load %arg8[%c1_12, %c0_13] : memref<48x64xbf16, #tpu.memory_space<vmem>>, vector<40x64xbf16>
    %c1_14 = arith.constant 1 : index
    %c0_15 = arith.constant 0 : index
    %c0_16 = arith.constant 0 : index
    %16 = vector.load %arg2[%c1_14, %c0_15, %c0_16] : memref<5x64x128xbf16, #tpu.memory_space<vmem>>, vector<1x64x128xbf16>
    %17 = vector.shape_cast %16 : vector<1x64x128xbf16> to vector<64x128xbf16>
    %cst_17 = arith.constant dense<0.000000e+00> : vector<40x128xf32>
    %18 = tpu.matmul %15, %17, %cst_17 {dimension_numbers = #tpu.dot_dimension_numbers<[1], [0], [0], [1], [0, 0, 1, 1], [], []>} : vector<40x64xbf16>, vector<64x128xbf16>, vector<40x128xf32> -> vector<40x128xf32>
    %19 = arith.addf %14, %18 : vector<40x128xf32>
    %c2_18 = arith.constant 2 : index
    %c0_19 = arith.constant 0 : index
    %20 = vector.load %arg8[%c2_18, %c0_19] : memref<48x64xbf16, #tpu.memory_space<vmem>>, vector<40x64xbf16>
    %c2_20 = arith.constant 2 : index
    %c0_21 = arith.constant 0 : index
    %c0_22 = arith.constant 0 : index
    %21 = vector.load %arg2[%c2_20, %c0_21, %c0_22] : memref<5x64x128xbf16, #tpu.memory_space<vmem>>, vector<1x64x128xbf16>
    %22 = vector.shape_cast %21 : vector<1x64x128xbf16> to vector<64x128xbf16>
    %cst_23 = arith.constant dense<0.000000e+00> : vector<40x128xf32>
    %23 = tpu.matmul %20, %22, %cst_23 {dimension_numbers = #tpu.dot_dimension_numbers<[1], [0], [0], [1], [0, 0, 1, 1], [], []>} : vector<40x64xbf16>, vector<64x128xbf16>, vector<40x128xf32> -> vector<40x128xf32>
    %24 = arith.addf %19, %23 : vector<40x128xf32>
    %c3 = arith.constant 3 : index
    %c0_24 = arith.constant 0 : index
    %25 = vector.load %arg8[%c3, %c0_24] : memref<48x64xbf16, #tpu.memory_space<vmem>>, vector<40x64xbf16>
    %c3_25 = arith.constant 3 : index
    %c0_26 = arith.constant 0 : index
    %c0_27 = arith.constant 0 : index
    %26 = vector.load %arg2[%c3_25, %c0_26, %c0_27] : memref<5x64x128xbf16, #tpu.memory_space<vmem>>, vector<1x64x128xbf16>
    %27 = vector.shape_cast %26 : vector<1x64x128xbf16> to vector<64x128xbf16>
    %cst_28 = arith.constant dense<0.000000e+00> : vector<40x128xf32>
    %28 = tpu.matmul %25, %27, %cst_28 {dimension_numbers = #tpu.dot_dimension_numbers<[1], [0], [0], [1], [0, 0, 1, 1], [], []>} : vector<40x64xbf16>, vector<64x128xbf16>, vector<40x128xf32> -> vector<40x128xf32>
    %29 = arith.addf %24, %28 : vector<40x128xf32>
    %c4 = arith.constant 4 : index
    %c0_29 = arith.constant 0 : index
    %30 = vector.load %arg8[%c4, %c0_29] : memref<48x64xbf16, #tpu.memory_space<vmem>>, vector<40x64xbf16>
    %c4_30 = arith.constant 4 : index
    %c0_31 = arith.constant 0 : index
    %c0_32 = arith.constant 0 : index
    %31 = vector.load %arg2[%c4_30, %c0_31, %c0_32] : memref<5x64x128xbf16, #tpu.memory_space<vmem>>, vector<1x64x128xbf16>
    %32 = vector.shape_cast %31 : vector<1x64x128xbf16> to vector<64x128xbf16>
    %cst_33 = arith.constant dense<0.000000e+00> : vector<40x128xf32>
    %33 = tpu.matmul %30, %32, %cst_33 {dimension_numbers = #tpu.dot_dimension_numbers<[1], [0], [0], [1], [0, 0, 1, 1], [], []>} : vector<40x64xbf16>, vector<64x128xbf16>, vector<40x128xf32> -> vector<40x128xf32>
    %34 = arith.addf %29, %33 : vector<40x128xf32>
    %c0_34 = arith.constant 0 : index
    %c0_35 = arith.constant 0 : index
    %35 = vector.load %arg3[%c0_34, %c0_35] : memref<1x128xf32, #tpu.memory_space<vmem>>, vector<1x128xf32>
    %36 = vector.broadcast %35 : vector<1x128xf32> to vector<40x128xf32>
    %37 = arith.addf %34, %36 : vector<40x128xf32>
    %cst_36 = arith.constant 0.000000e+00 : f32
    %38 = vector.broadcast %cst_36 : f32 to vector<40x128xf32>
    %39 = arith.maximumf %37, %38 : vector<40x128xf32>
    %40 = vector.extract_strided_slice %39 {offsets = [0, 0], sizes = [16, 128], strides = [1, 1]} : vector<40x128xf32> to vector<16x128xf32>
    %41 = arith.truncf %40 : vector<16x128xf32> to vector<16x128xbf16>
    %c2_37 = arith.constant 2 : index
    %c0_38 = arith.constant 0 : index
    %42 = vector.load %arg9[%c2_37, %c0_38] : memref<48x128xbf16, #tpu.memory_space<vmem>>, vector<16x128xbf16>
    tpu.vector_store %arg9[%c2_37, %c0_38], %41 {strides = array<i32>} : memref<48x128xbf16, #tpu.memory_space<vmem>>, vector<16x128xbf16>,
    %43 = vector.extract_strided_slice %39 {offsets = [24, 0], sizes = [16, 128], strides = [1, 1]} : vector<40x128xf32> to vector<16x128xf32>
    %44 = arith.truncf %43 : vector<16x128xf32> to vector<16x128xbf16>
    %c26_39 = arith.constant 26 : index
    %c0_40 = arith.constant 0 : index
    %45 = vector.load %arg9[%c26_39, %c0_40] : memref<48x128xbf16, #tpu.memory_space<vmem>>, vector<16x128xbf16>
    tpu.vector_store %arg9[%c26_39, %c0_40], %44 {strides = array<i32>} : memref<48x128xbf16, #tpu.memory_space<vmem>>, vector<16x128xbf16>,
    %c0_41 = arith.constant 0 : index
    %c0_42 = arith.constant 0 : index
    %46 = vector.load %arg9[%c0_41, %c0_42] : memref<48x128xbf16, #tpu.memory_space<vmem>>, vector<40x128xbf16>
    %c0_43 = arith.constant 0 : index
    %c0_44 = arith.constant 0 : index
    %c0_45 = arith.constant 0 : index
    %47 = vector.load %arg4[%c0_43, %c0_44, %c0_45] : memref<5x128x128xbf16, #tpu.memory_space<vmem>>, vector<1x128x128xbf16>
    %48 = vector.shape_cast %47 : vector<1x128x128xbf16> to vector<128x128xbf16>
    %cst_46 = arith.constant dense<0.000000e+00> : vector<40x128xf32>
    %49 = tpu.matmul %46, %48, %cst_46 {dimension_numbers = #tpu.dot_dimension_numbers<[1], [0], [0], [1], [0, 0, 1, 1], [], []>} : vector<40x128xbf16>, vector<128x128xbf16>, vector<40x128xf32> -> vector<40x128xf32>
    %c1_47 = arith.constant 1 : index
    %c0_48 = arith.constant 0 : index
    %50 = vector.load %arg9[%c1_47, %c0_48] : memref<48x128xbf16, #tpu.memory_space<vmem>>, vector<40x128xbf16>
    %c1_49 = arith.constant 1 : index
    %c0_50 = arith.constant 0 : index
    %c0_51 = arith.constant 0 : index
    %51 = vector.load %arg4[%c1_49, %c0_50, %c0_51] : memref<5x128x128xbf16, #tpu.memory_space<vmem>>, vector<1x128x128xbf16>
    %52 = vector.shape_cast %51 : vector<1x128x128xbf16> to vector<128x128xbf16>
    %cst_52 = arith.constant dense<0.000000e+00> : vector<40x128xf32>
    %53 = tpu.matmul %50, %52, %cst_52 {dimension_numbers = #tpu.dot_dimension_numbers<[1], [0], [0], [1], [0, 0, 1, 1], [], []>} : vector<40x128xbf16>, vector<128x128xbf16>, vector<40x128xf32> -> vector<40x128xf32>
    %54 = arith.addf %49, %53 : vector<40x128xf32>
    %c2_53 = arith.constant 2 : index
    %c0_54 = arith.constant 0 : index
    %55 = vector.load %arg9[%c2_53, %c0_54] : memref<48x128xbf16, #tpu.memory_space<vmem>>, vector<40x128xbf16>
    %c2_55 = arith.constant 2 : index
    %c0_56 = arith.constant 0 : index
    %c0_57 = arith.constant 0 : index
    %56 = vector.load %arg4[%c2_55, %c0_56, %c0_57] : memref<5x128x128xbf16, #tpu.memory_space<vmem>>, vector<1x128x128xbf16>
    %57 = vector.shape_cast %56 : vector<1x128x128xbf16> to vector<128x128xbf16>
    %cst_58 = arith.constant dense<0.000000e+00> : vector<40x128xf32>
    %58 = tpu.matmul %55, %57, %cst_58 {dimension_numbers = #tpu.dot_dimension_numbers<[1], [0], [0], [1], [0, 0, 1, 1], [], []>} : vector<40x128xbf16>, vector<128x128xbf16>, vector<40x128xf32> -> vector<40x128xf32>
    %59 = arith.addf %54, %58 : vector<40x128xf32>
    %c3_59 = arith.constant 3 : index
    %c0_60 = arith.constant 0 : index
    %60 = vector.load %arg9[%c3_59, %c0_60] : memref<48x128xbf16, #tpu.memory_space<vmem>>, vector<40x128xbf16>
    %c3_61 = arith.constant 3 : index
    %c0_62 = arith.constant 0 : index
    %c0_63 = arith.constant 0 : index
    %61 = vector.load %arg4[%c3_61, %c0_62, %c0_63] : memref<5x128x128xbf16, #tpu.memory_space<vmem>>, vector<1x128x128xbf16>
    %62 = vector.shape_cast %61 : vector<1x128x128xbf16> to vector<128x128xbf16>
    %cst_64 = arith.constant dense<0.000000e+00> : vector<40x128xf32>
    %63 = tpu.matmul %60, %62, %cst_64 {dimension_numbers = #tpu.dot_dimension_numbers<[1], [0], [0], [1], [0, 0, 1, 1], [], []>} : vector<40x128xbf16>, vector<128x128xbf16>, vector<40x128xf32> -> vector<40x128xf32>
    %64 = arith.addf %59, %63 : vector<40x128xf32>
    %c4_65 = arith.constant 4 : index
    %c0_66 = arith.constant 0 : index
    %65 = vector.load %arg9[%c4_65, %c0_66] : memref<48x128xbf16, #tpu.memory_space<vmem>>, vector<40x128xbf16>
    %c4_67 = arith.constant 4 : index
    %c0_68 = arith.constant 0 : index
    %c0_69 = arith.constant 0 : index
    %66 = vector.load %arg4[%c4_67, %c0_68, %c0_69] : memref<5x128x128xbf16, #tpu.memory_space<vmem>>, vector<1x128x128xbf16>
    %67 = vector.shape_cast %66 : vector<1x128x128xbf16> to vector<128x128xbf16>
    %cst_70 = arith.constant dense<0.000000e+00> : vector<40x128xf32>
    %68 = tpu.matmul %65, %67, %cst_70 {dimension_numbers = #tpu.dot_dimension_numbers<[1], [0], [0], [1], [0, 0, 1, 1], [], []>} : vector<40x128xbf16>, vector<128x128xbf16>, vector<40x128xf32> -> vector<40x128xf32>
    %69 = arith.addf %64, %68 : vector<40x128xf32>
    %c2_71 = arith.constant 2 : index
    %c0_72 = arith.constant 0 : index
    %70 = vector.load %arg8[%c2_71, %c0_72] : memref<48x64xbf16, #tpu.memory_space<vmem>>, vector<40x64xbf16>
    %c0_73 = arith.constant 0 : index
    %c0_74 = arith.constant 0 : index
    %71 = vector.load %arg6[%c0_73, %c0_74] : memref<64x128xbf16, #tpu.memory_space<vmem>>, vector<64x128xbf16>
    %cst_75 = arith.constant dense<0.000000e+00> : vector<40x128xf32>
    %72 = tpu.matmul %70, %71, %cst_75 {dimension_numbers = #tpu.dot_dimension_numbers<[1], [0], [0], [1], [0, 0, 1, 1], [], []>} : vector<40x64xbf16>, vector<64x128xbf16>, vector<40x128xf32> -> vector<40x128xf32>
    %73 = arith.addf %69, %72 : vector<40x128xf32>
    %c0_76 = arith.constant 0 : index
    %c0_77 = arith.constant 0 : index
    %74 = vector.load %arg5[%c0_76, %c0_77] : memref<1x128xf32, #tpu.memory_space<vmem>>, vector<1x128xf32>
    %75 = vector.broadcast %74 : vector<1x128xf32> to vector<40x128xf32>
    %76 = arith.addf %73, %75 : vector<40x128xf32>
    %77 = vector.extract_strided_slice %76 {offsets = [0, 0], sizes = [16, 128], strides = [1, 1]} : vector<40x128xf32> to vector<16x128xf32>
    %c0_78 = arith.constant 0 : index
    %c0_79 = arith.constant 0 : index
    %c0_80 = arith.constant 0 : index
    %78 = vector.load %arg7[%c0_78, %c0_79, %c0_80] : memref<2x16x128xf32, #tpu.memory_space<vmem>>, vector<1x16x128xf32>
    %79 = vector.shape_cast %78 : vector<1x16x128xf32> to vector<16x128xf32>
    %80 = vector.shape_cast %77 : vector<16x128xf32> to vector<1x16x128xf32>
    tpu.vector_store %arg7[%c0_78, %c0_79, %c0_80], %80 {strides = array<i32>} : memref<2x16x128xf32, #tpu.memory_space<vmem>>, vector<1x16x128xf32>,
    %81 = vector.extract_strided_slice %76 {offsets = [24, 0], sizes = [16, 128], strides = [1, 1]} : vector<40x128xf32> to vector<16x128xf32>
    %c1_81 = arith.constant 1 : index
    %c0_82 = arith.constant 0 : index
    %c0_83 = arith.constant 0 : index
    %82 = vector.load %arg7[%c1_81, %c0_82, %c0_83] : memref<2x16x128xf32, #tpu.memory_space<vmem>>, vector<1x16x128xf32>
    %83 = vector.shape_cast %82 : vector<1x16x128xf32> to vector<16x128xf32>
    %84 = vector.shape_cast %81 : vector<16x128xf32> to vector<1x16x128xf32>
    tpu.vector_store %arg7[%c1_81, %c0_82, %c0_83], %84 {strides = array<i32>} : memref<2x16x128xf32, #tpu.memory_space<vmem>>, vector<1x16x128xf32>,
    return
  }
  func.func @transform_0(%arg0: i32) -> (i32, i32, i32) {
    %c0_i32 = arith.constant 0 : i32
    %c0_i32_0 = arith.constant 0 : i32
    %c0_i32_1 = arith.constant 0 : i32
    return %arg0, %c0_i32, %c0_i32_0 : i32, i32, i32
  }
  func.func @transform_1(%arg0: i32) -> (i32, i32, i32) {
    %c0_i32 = arith.constant 0 : i32
    %c0_i32_0 = arith.constant 0 : i32
    %c0_i32_1 = arith.constant 0 : i32
    %c0_i32_2 = arith.constant 0 : i32
    return %c0_i32, %c0_i32_0, %c0_i32_1 : i32, i32, i32
  }
  func.func @transform_2(%arg0: i32) -> (i32, i32) {
    %c0_i32 = arith.constant 0 : i32
    %c0_i32_0 = arith.constant 0 : i32
    %c0_i32_1 = arith.constant 0 : i32
    return %c0_i32, %c0_i32_0 : i32, i32
  }
  func.func @transform_3(%arg0: i32) -> (i32, i32, i32) {
    %c0_i32 = arith.constant 0 : i32
    %c0_i32_0 = arith.constant 0 : i32
    %c0_i32_1 = arith.constant 0 : i32
    %c0_i32_2 = arith.constant 0 : i32
    return %c0_i32, %c0_i32_0, %c0_i32_1 : i32, i32, i32
  }
  func.func @transform_4(%arg0: i32) -> (i32, i32) {
    %c0_i32 = arith.constant 0 : i32
    %c0_i32_0 = arith.constant 0 : i32
    %c0_i32_1 = arith.constant 0 : i32
    return %c0_i32, %c0_i32_0 : i32, i32
  }
  func.func @transform_5(%arg0: i32) -> (i32, i32) {
    %c0_i32 = arith.constant 0 : i32
    %c0_i32_0 = arith.constant 0 : i32
    %c0_i32_1 = arith.constant 0 : i32
    return %c0_i32, %c0_i32_0 : i32, i32
  }
  func.func @transform_6(%arg0: i32) -> (i32, i32, i32) {
    %c0_i32 = arith.constant 0 : i32
    %c0_i32_0 = arith.constant 0 : i32
    %c0_i32_1 = arith.constant 0 : i32
    return %arg0, %c0_i32, %c0_i32_0 : i32, i32, i32
  }
}

</mosaic_0001>

<llo_original>
// kernel: forward.1
$region0: #{forward.1}
  #allocation0 [shape = 'u32[]', space=smem, size = 0x4, offset = 0x4, fixed_abs, tag = 'smem constant byte address 0x4 - core index']
  #allocation1 [shape = 'u32[144,128]{1,0:T(1,128)}', space=vmem, size = 0x12000, scoped, tag = 'internal scratch']
  #allocation2 [shape = 'bf16[48,64]{1,0:T(16,128)(2,1)}', space=vmem, size = 0x3000, scoped, tag = 'scratch operand']
  #allocation3 [shape = 'bf16[48,128]{1,0:T(16,128)(2,1)}', space=vmem, size = 0x3000, scoped, tag = 'scratch operand']
  %s0 = inlined_call_operand.vmem [shape: f32[2,16,64], index: 0, kind: input, shape index: {}]
  %s1 = inlined_call_operand.hbm [shape: bf16[5,64,128], index: 1, kind: input, shape index: {}]
  %s2 = inlined_call_operand.vmem [shape: f32[1,128], index: 2, kind: input, shape index: {}]
  %s3 = inlined_call_operand.vmem [shape: bf16[5,128,128], index: 3, kind: input, shape index: {}]
  %s4 = inlined_call_operand.vmem [shape: f32[1,128], index: 4, kind: input, shape index: {}]
  %s5 = inlined_call_operand.vmem [shape: bf16[64,128], index: 5, kind: input, shape index: {}]
  %s6 = inlined_call_operand.vmem [shape: f32[2,16,128], index: 6, kind: output, shape index: {}]
  %s7 = sld [smem:[#allocation0]]
  $region42: #{forward.1} parent=0
    _
  %s9 = ssub.s32 1, %s7
  %s10 = scalar_select 0, %s9, %s7
  $region1: #{forward.1} parent=0
    #allocation4 [shape = 'u8[81920]{0}', space=vmem, size = 0x14000, scoped, tag = 'input window, operand 1, single buffered']
    #allocation5 [shape = 's32[1]{0}', space=sflag, size = 0x4, scoped, tag = 'scoped memory for forward.1']
    %11 = vsyncpa [#allocation5], 0
    // Predicated region
    $region2: #{forward.1} parent=1 // pred_check
      _
    $region3: #{forward.1} parent=1 // pred_check_branch
      %13 = sbr.rel (0) target = $region5
    $region4: #{forward.1} parent=1 // pred_region
      _
    $region5: #{forward.1} parent=1 // pred_fallthru
      _
    // Predicated region
    $region6: #{forward.1} parent=1 // pred_check
      _
    $region7: #{forward.1} parent=1 // pred_check_branch
      %15 = sbr.rel (0) target = $region9
    $region8: #{forward.1} parent=1 // pred_region
      %s17 = ssub.s32 2560, 2560
      %18 = vsyncadd [#allocation5], %s17
      %s19 = sshll.u32 [#allocation4], 4
      %s20 = int_to_ptr.vmem [resolvable:$true] %s19
      %25 = dma.hbm_to_vmem [thread:$0]  %s1, 2560, %s20, [#allocation5], 64, 64, 4
    $region9: #{forward.1} parent=1 // pred_fallthru
      _
    // Predicated region
    $region10: #{forward.1} parent=1 // pred_check
      _
    $region11: #{forward.1} parent=1 // pred_check_branch
      %27 = sbr.rel (0) target = $region13
    $region12: #{forward.1} parent=1 // pred_region
      _
    $region13: #{forward.1} parent=1 // pred_fallthru
      _
    // Predicated region
    $region14: #{forward.1} parent=1 // pred_check
      _
    $region15: #{forward.1} parent=1 // pred_check_branch
      %29 = sbr.rel (0) target = $region17
    $region16: #{forward.1} parent=1 // pred_region
      _
    $region17: #{forward.1} parent=1 // pred_fallthru
      _
    // Predicated region
    $region18: #{forward.1} parent=1 // pred_check
      _
    $region19: #{forward.1} parent=1 // pred_check_branch
      %31 = sbr.rel (0) target = $region21
    $region20: #{forward.1} parent=1 // pred_region
      _
    $region21: #{forward.1} parent=1 // pred_fallthru
      _
    // Predicated region
    $region22: #{forward.1} parent=1 // pred_check
      _
    $region23: #{forward.1} parent=1 // pred_check_branch
      %33 = sbr.rel (0) target = $region25
    $region24: #{forward.1} parent=1 // pred_region
      _
    $region25: #{forward.1} parent=1 // pred_fallthru
      _
    // Predicated region
    $region26: #{forward.1} parent=1 // pred_check
      _
    $region27: #{forward.1} parent=1 // pred_check_branch
      %35 = sbr.rel (0) target = $region29
    $region28: #{forward.1} parent=1 // pred_region
      %36 = dma.done [#allocation5], 2560
    $region29: #{forward.1} parent=1 // pred_fallthru
      _
    %p38 = scmp.eq.s32.totalorder 0, 0
    // Predicated region
    $region30: #{forward.1} parent=1 // pred_check
      %p39 = pneg %p38
    $region31: #{forward.1} parent=1 // pred_check_branch
      %41 = sbr.rel (%p39) target = $region33
    $region32: #{forward.1} parent=1 // pred_region
      %vm42 = vcmask 523264
      %43 = vst.msk [vmem:[#allocation2] sm:$0xff] %vm42, 0
      %44 = vst.msk [vmem:[#allocation2 + $0x8] sm:$0xff] %vm42, 0
      %45 = vst.msk [vmem:[#allocation2 + $0x10] sm:$0xff] %vm42, 0
      %46 = vst [vmem:[#allocation3] sm:$0xff] 0
      %47 = vst [vmem:[#allocation3 + $0x8] sm:$0xff] 0
      %48 = vst [vmem:[#allocation3 + $0x10] sm:$0xff] 0
    $region33: #{forward.1} parent=1 // pred_fallthru
      _
    %v49 = vld [vmem:[%s0] sm:$0xff]
    %v50 = vld [vmem:[%s0 + $0x8] sm:$0xff]
    %v51 = vpack.c.bf16 %v50, %v49
    %v53 = vrot.slane %v51, 7
    %vm55 = vcmask 523265
    %56 = vst.msk [vmem:[#allocation2] sm:$0xfe] %vm55, %v53
    %vm57 = vcmask 516096
    %58 = vst.msk [vmem:[#allocation2 + $0x8] sm:$0x1] %vm57, %v53
    %s59 = scalar_lea.vmem %s0, 16
    %v60 = vld [vmem:[%s59] sm:$0xff]
    %v61 = vld [vmem:[%s59 + $0x8] sm:$0xff]
    %v62 = vpack.c.bf16 %v61, %v60
    %v64 = vrot.slane %v62, 3
    %vm66 = vcmask 523269
    %67 = vst.msk [vmem:[#allocation2 + $0x8] sm:$0xe0] %vm66, %v64
    %vm68 = vcmask 520192
    %69 = vst.msk [vmem:[#allocation2 + $0x10] sm:$0x1f] %vm68, %v64
    %v70 = vld [vmem:[#allocation2] sm:$0xff]
    %v71 = vld [vmem:[#allocation2 + $0x8] sm:$0xff]
    %v72 = vld [vmem:[#allocation2 + $0x10] sm:$0xf]
    %v73 = vld [vmem:[#allocation4] sm:$0xf]
    %v74 = vld [vmem:[#allocation4 + $0x4] sm:$0xf]
    %v75 = vld [vmem:[#allocation4 + $0x8] sm:$0xf]
    %v76 = vld [vmem:[#allocation4 + $0xc] sm:$0xf]
    %v77 = vld [vmem:[#allocation4 + $0x10] sm:$0xf]
    %v78 = vld [vmem:[#allocation4 + $0x14] sm:$0xf]
    %v79 = vld [vmem:[#allocation4 + $0x18] sm:$0xf]
    %v80 = vld [vmem:[#allocation4 + $0x1c] sm:$0xf]
    %v81 = vld [vmem:[#allocation2 + $0x10] sm:$0x1f]
    %s82 = scalar_lea.vmem [#allocation4], 32
    %v83 = vld [vmem:[%s82] sm:$0xf]
    %v84 = vld [vmem:[%s82 + $0x4] sm:$0xf]
    %v85 = vld [vmem:[%s82 + $0x8] sm:$0xf]
    %v86 = vld [vmem:[%s82 + $0xc] sm:$0xf]
    %v87 = vld [vmem:[%s82 + $0x10] sm:$0xf]
    %v88 = vld [vmem:[%s82 + $0x14] sm:$0xf]
    %v89 = vld [vmem:[%s82 + $0x18] sm:$0xf]
    %v90 = vld [vmem:[%s82 + $0x1c] sm:$0xf]
    %vm91 = vsmask.f32 7424
    %v93 = vshrl.u32 %v70, 16
    %v95 = vshll.u32 %v70, 16
    %v97 = vrot.slane %v95, 1
    %v98 = vor.u32 %v93, %v97
    %v100 = vshll.u32 %v71, 16
    %v102 = vrot.slane %v100, 1
    %v103 = vsel %vm91, %v98, %v102
    %v104 = vshrl.u32 %v71, 16
    %v106 = vor.u32 %v104, %v102
    %v108 = vshll.u32 %v81, 16
    %v110 = vrot.slane %v108, 1
    %v111 = vsel %vm91, %v106, %v110
    %v112 = vshrl.u32 %v81, 16
    %v114 = vor.u32 %v112, %v110
    %v123 = vunpack.c.l.b16 %v83
    %v124 = vunpack.c.l.b16 %v84
    %v125 = vunpack.c.l.b16 %v85
    %v126 = vunpack.c.l.b16 %v86
    %v127 = vunpack.c.l.b16 %v87
    %v128 = vunpack.c.l.b16 %v88
    %v129 = vunpack.c.l.b16 %v89
    %v130 = vunpack.c.l.b16 %v90
    %v131 = vpack.c.b16 %v124, %v123
    %v132 = vpack.c.b16 %v126, %v125
    %v133 = vpack.c.b16 %v128, %v127
    %v134 = vpack.c.b16 %v130, %v129
    %vm139 = vcmask 523264
    %v141 = vsel %vm139, %v103, 0
    %v144 = vsel %vm139, %v111, 0
    %v147 = vsel %vm139, %v114, 0
    %149 = vmatprep.subr.bf16.mxu0 0
    %150 = vmatpush1.bf16.msra.mxu0 %v131
    %151 = vmatprep.subr.bf16.mxu0 0
    %152 = vmatpush1.bf16.msra.mxu0 %v132
    %153 = vmatprep.subr.bf16.mxu0 0
    %154 = vmatpush1.bf16.msra.mxu0 %v133
    %155 = vmatprep.subr.bf16.mxu0 0
    %156 = vmatpush1.bf16.msra.mxu0 %v134
    %157 = vmatprep.subr.bf16.mxu0 0
    %158 = vmatpush1.bf16.msra.mxu0 0
    %159 = vmatprep.subr.bf16.mxu0 0
    %160 = vmatpush1.bf16.msra.mxu0 0
    %161 = vmatprep.subr.bf16.mxu0 0
    %162 = vmatpush1.bf16.msra.mxu0 0
    %163 = vmatprep.subr.bf16.mxu0 0
    %164 = vmatpush1.bf16.msra.mxu0 0
    %165 = vmatprep.subr.bf16.mxu0 0
    %166 = vmatpush1.bf16.msra.mxu0 0
    %167 = vmatprep.subr.bf16.mxu0 0
    %168 = vmatpush1.bf16.msra.mxu0 0
    %169 = vmatprep.subr.bf16.mxu0 0
    %170 = vmatpush1.bf16.msra.mxu0 0
    %171 = vmatprep.subr.bf16.mxu0 0
    %172 = vmatpush1.bf16.msra.mxu0 0
    %173 = vmatprep.subr.bf16.mxu0 0
    %174 = vmatpush1.bf16.msra.mxu0 0
    %175 = vmatprep.subr.bf16.mxu0 0
    %176 = vmatpush1.bf16.msra.mxu0 0
    %177 = vmatprep.subr.bf16.mxu0 0
    %178 = vmatpush1.bf16.msra.mxu0 0
    %179 = vmatprep.subr.bf16.mxu0 0
    %180 = vmatpush1.bf16.msra.mxu0 0
    %181 = vmatprep.mubr.bf16.mxu0 0
    %182 = vmatmul.mubr.bf16.gmra.mrb[0].mxu0 %v141
    %v183 = vpop.f32.mrb[0].mxu0
    %v184 = vadd.f32 0.0, %v183
    %v185 = vpop.f32.mrb[0].mxu0
    %v186 = vpop.f32.mrb[0].mxu0
    %v187 = vadd.f32 0.0, %v186
    %v188 = vpop.f32.mrb[0].mxu0
    %189 = vmatprep.mubr.bf16.mxu0 0
    %190 = vmatmul.mubr.bf16.gmra.mrb[0].mxu0 %v144
    %v191 = vpop.f32.mrb[0].mxu0
    %v192 = vpop.f32.mrb[0].mxu0
    %v193 = vpop.f32.mrb[0].mxu0
    %v194 = vadd.f32 0.0, %v193
    %v195 = vpop.f32.mrb[0].mxu0
    %196 = vmatprep.mubr.bf16.mxu0 0
    %197 = vmatmul.mubr.bf16.gmra.mrb[0].mxu0 %v147
    %v198 = vpop.f32.mrb[0].mxu0
    %v199 = vadd.f32 0.0, %v198
    %v200 = vpop.f32.mrb[0].mxu0
    %v201 = vpop.f32.mrb[0].mxu0
    %v202 = vpop.f32.mrb[0].mxu0
    %203 = vdwg.mxu0
    %v212 = vunpack.c.l.b16 %v73
    %v213 = vunpack.c.l.b16 %v74
    %v214 = vunpack.c.l.b16 %v75
    %v215 = vunpack.c.l.b16 %v76
    %v216 = vunpack.c.l.b16 %v77
    %v217 = vunpack.c.l.b16 %v78
    %v218 = vunpack.c.l.b16 %v79
    %v219 = vunpack.c.l.b16 %v80
    %v220 = vpack.c.b16 %v213, %v212
    %v221 = vpack.c.b16 %v215, %v214
    %v222 = vpack.c.b16 %v217, %v216
    %v223 = vpack.c.b16 %v219, %v218
    %v228 = vsel %vm139, %v70, 0
    %v230 = vsel %vm139, %v71, 0
    %v233 = vsel %vm139, %v72, 0
    %235 = vmatprep.subr.bf16.mxu0 0
    %236 = vmatpush1.bf16.msra.mxu0 %v220
    %237 = vmatprep.subr.bf16.mxu0 0
    %238 = vmatpush1.bf16.msra.mxu0 %v221
    %239 = vmatprep.subr.bf16.mxu0 0
    %240 = vmatpush1.bf16.msra.mxu0 %v222
    %241 = vmatprep.subr.bf16.mxu0 0
    %242 = vmatpush1.bf16.msra.mxu0 %v223
    %243 = vmatprep.subr.bf16.mxu0 0
    %244 = vmatpush1.bf16.msra.mxu0 0
    %245 = vmatprep.subr.bf16.mxu0 0
    %246 = vmatpush1.bf16.msra.mxu0 0
    %247 = vmatprep.subr.bf16.mxu0 0
    %248 = vmatpush1.bf16.msra.mxu0 0
    %249 = vmatprep.subr.bf16.mxu0 0
    %250 = vmatpush1.bf16.msra.mxu0 0
    %251 = vmatprep.subr.bf16.mxu0 0
    %252 = vmatpush1.bf16.msra.mxu0 0
    %253 = vmatprep.subr.bf16.mxu0 0
    %254 = vmatpush1.bf16.msra.mxu0 0
    %255 = vmatprep.subr.bf16.mxu0 0
    %256 = vmatpush1.bf16.msra.mxu0 0
    %257 = vmatprep.subr.bf16.mxu0 0
    %258 = vmatpush1.bf16.msra.mxu0 0
    %259 = vmatprep.subr.bf16.mxu0 0
    %260 = vmatpush1.bf16.msra.mxu0 0
    %261 = vmatprep.subr.bf16.mxu0 0
    %262 = vmatpush1.bf16.msra.mxu0 0
    %263 = vmatprep.subr.bf16.mxu0 0
    %264 = vmatpush1.bf16.msra.mxu0 0
    %265 = vmatprep.subr.bf16.mxu0 0
    %266 = vmatpush1.bf16.msra.mxu0 0
    %267 = vmatprep.mubr.bf16.mxu0 0
    %268 = vmatmul.mubr.bf16.gmra.mrb[0].mxu0 %v228
    %v269 = vpop.f32.mrb[0].mxu0
    %v270 = vadd.f32 %v184, %v269
    %v271 = vpop.f32.mrb[0].mxu0
    %v272 = vpop.f32.mrb[0].mxu0
    %v273 = vadd.f32 %v187, %v272
    %v274 = vpop.f32.mrb[0].mxu0
    %275 = vmatprep.mubr.bf16.mxu0 0
    %276 = vmatmul.mubr.bf16.gmra.mrb[0].mxu0 %v230
    %v277 = vpop.f32.mrb[0].mxu0
    %v278 = vpop.f32.mrb[0].mxu0
    %v279 = vpop.f32.mrb[0].mxu0
    %v280 = vadd.f32 %v194, %v279
    %v281 = vpop.f32.mrb[0].mxu0
    %282 = vmatprep.mubr.bf16.mxu0 0
    %283 = vmatmul.mubr.bf16.gmra.mrb[0].mxu0 %v233
    %v284 = vpop.f32.mrb[0].mxu0
    %v285 = vadd.f32 %v199, %v284
    %v286 = vpop.f32.mrb[0].mxu0
    %v287 = vpop.f32.mrb[0].mxu0
    %v288 = vpop.f32.mrb[0].mxu0
    %289 = vdwg.mxu0
    %v290 = vld [vmem:[#allocation2] sm:$0xfe]
    %s291 = scalar_lea.vmem [#allocation4], 64
    %v292 = vld [vmem:[%s291] sm:$0xf]
    %v293 = vld [vmem:[%s291 + $0x4] sm:$0xf]
    %v294 = vld [vmem:[%s291 + $0x8] sm:$0xf]
    %v295 = vld [vmem:[%s291 + $0xc] sm:$0xf]
    %v296 = vld [vmem:[%s291 + $0x10] sm:$0xf]
    %v297 = vld [vmem:[%s291 + $0x14] sm:$0xf]
    %v298 = vld [vmem:[%s291 + $0x18] sm:$0xf]
    %v299 = vld [vmem:[%s291 + $0x1c] sm:$0xf]
    %vm303 = vcmask 1046528
    %v304 = vrot.slane %v290, 1
    %v305 = vrot.slane %v71, 1
    %v306 = vsel %vm303, %v304, %v305
    %v307 = vrot.slane %v81, 1
    %v308 = vsel %vm303, %v305, %v307
    %v317 = vunpack.c.l.b16 %v292
    %v318 = vunpack.c.l.b16 %v293
    %v319 = vunpack.c.l.b16 %v294
    %v320 = vunpack.c.l.b16 %v295
    %v321 = vunpack.c.l.b16 %v296
    %v322 = vunpack.c.l.b16 %v297
    %v323 = vunpack.c.l.b16 %v298
    %v324 = vunpack.c.l.b16 %v299
    %v325 = vpack.c.b16 %v318, %v317
    %v326 = vpack.c.b16 %v320, %v319
    %v327 = vpack.c.b16 %v322, %v321
    %v328 = vpack.c.b16 %v324, %v323
    %v334 = vsel %vm139, %v306, 0
    %v337 = vsel %vm139, %v308, 0
    %v340 = vsel %vm139, %v307, 0
    %342 = vmatprep.subr.bf16.mxu0 0
    %343 = vmatpush1.bf16.msra.mxu0 %v325
    %344 = vmatprep.subr.bf16.mxu0 0
    %345 = vmatpush1.bf16.msra.mxu0 %v326
    %346 = vmatprep.subr.bf16.mxu0 0
    %347 = vmatpush1.bf16.msra.mxu0 %v327
    %348 = vmatprep.subr.bf16.mxu0 0
    %349 = vmatpush1.bf16.msra.mxu0 %v328
    %350 = vmatprep.subr.bf16.mxu0 0
    %351 = vmatpush1.bf16.msra.mxu0 0
    %352 = vmatprep.subr.bf16.mxu0 0
    %353 = vmatpush1.bf16.msra.mxu0 0
    %354 = vmatprep.subr.bf16.mxu0 0
    %355 = vmatpush1.bf16.msra.mxu0 0
    %356 = vmatprep.subr.bf16.mxu0 0
    %357 = vmatpush1.bf16.msra.mxu0 0
    %358 = vmatprep.subr.bf16.mxu0 0
    %359 = vmatpush1.bf16.msra.mxu0 0
    %360 = vmatprep.subr.bf16.mxu0 0
    %361 = vmatpush1.bf16.msra.mxu0 0
    %362 = vmatprep.subr.bf16.mxu0 0
    %363 = vmatpush1.bf16.msra.mxu0 0
    %364 = vmatprep.subr.bf16.mxu0 0
    %365 = vmatpush1.bf16.msra.mxu0 0
    %366 = vmatprep.subr.bf16.mxu0 0
    %367 = vmatpush1.bf16.msra.mxu0 0
    %368 = vmatprep.subr.bf16.mxu0 0
    %369 = vmatpush1.bf16.msra.mxu0 0
    %370 = vmatprep.subr.bf16.mxu0 0
    %371 = vmatpush1.bf16.msra.mxu0 0
    %372 = vmatprep.subr.bf16.mxu0 0
    %373 = vmatpush1.bf16.msra.mxu0 0
    %374 = vmatprep.mubr.bf16.mxu0 0
    %375 = vmatmul.mubr.bf16.gmra.mrb[0].mxu0 %v334
    %v376 = vpop.f32.mrb[0].mxu0
    %v377 = vadd.f32 0.0, %v376
    %v378 = vpop.f32.mrb[0].mxu0
    %v379 = vpop.f32.mrb[0].mxu0
    %v380 = vadd.f32 0.0, %v379
    %v381 = vpop.f32.mrb[0].mxu0
    %382 = vmatprep.mubr.bf16.mxu0 0
    %383 = vmatmul.mubr.bf16.gmra.mrb[0].mxu0 %v337
    %v384 = vpop.f32.mrb[0].mxu0
    %v385 = vpop.f32.mrb[0].mxu0
    %v386 = vpop.f32.mrb[0].mxu0
    %v387 = vadd.f32 0.0, %v386
    %v388 = vpop.f32.mrb[0].mxu0
    %389 = vmatprep.mubr.bf16.mxu0 0
    %390 = vmatmul.mubr.bf16.gmra.mrb[0].mxu0 %v340
    %v391 = vpop.f32.mrb[0].mxu0
    %v392 = vadd.f32 0.0, %v391
    %v393 = vpop.f32.mrb[0].mxu0
    %v394 = vpop.f32.mrb[0].mxu0
    %v395 = vpop.f32.mrb[0].mxu0
    %396 = vdwg.mxu0
    %v397 = vadd.f32 %v270, %v377
    %v398 = vadd.f32 %v273, %v380
    %v399 = vadd.f32 %v280, %v387
    %v400 = vadd.f32 %v285, %v392
    %v401 = vld [vmem:[#allocation2 + $0x10] sm:$0x3f]
    %s402 = scalar_lea.vmem [#allocation4], 96
    %v403 = vld [vmem:[%s402] sm:$0xf]
    %v404 = vld [vmem:[%s402 + $0x4] sm:$0xf]
    %v405 = vld [vmem:[%s402 + $0x8] sm:$0xf]
    %v406 = vld [vmem:[%s402 + $0xc] sm:$0xf]
    %v407 = vld [vmem:[%s402 + $0x10] sm:$0xf]
    %v408 = vld [vmem:[%s402 + $0x14] sm:$0xf]
    %v409 = vld [vmem:[%s402 + $0x18] sm:$0xf]
    %v410 = vld [vmem:[%s402 + $0x1c] sm:$0xf]
    %vm411 = vsmask.f32 6400
    %v413 = vshrl.u32 %v290, 16
    %v415 = vrot.slane %v413, 1
    %v416 = vshll.u32 %v290, 16
    %v418 = vrot.slane %v416, 2
    %v419 = vor.u32 %v415, %v418
    %v420 = vrot.slane %v104, 1
    %v421 = vrot.slane %v100, 2
    %v422 = vor.u32 %v420, %v421
    %v423 = vsel %vm411, %v419, %v422
    %v425 = vshrl.u32 %v401, 16
    %v427 = vrot.slane %v425, 1
    %v428 = vshll.u32 %v401, 16
    %v430 = vrot.slane %v428, 2
    %v431 = vor.u32 %v427, %v430
    %v432 = vsel %vm411, %v422, %v431
    %v441 = vunpack.c.l.b16 %v403
    %v442 = vunpack.c.l.b16 %v404
    %v443 = vunpack.c.l.b16 %v405
    %v444 = vunpack.c.l.b16 %v406
    %v445 = vunpack.c.l.b16 %v407
    %v446 = vunpack.c.l.b16 %v408
    %v447 = vunpack.c.l.b16 %v409
    %v448 = vunpack.c.l.b16 %v410
    %v449 = vpack.c.b16 %v442, %v441
    %v450 = vpack.c.b16 %v444, %v443
    %v451 = vpack.c.b16 %v446, %v445
    %v452 = vpack.c.b16 %v448, %v447
    %v458 = vsel %vm139, %v423, 0
    %v461 = vsel %vm139, %v432, 0
    %v464 = vsel %vm139, %v431, 0
    %466 = vmatprep.subr.bf16.mxu0 0
    %467 = vmatpush1.bf16.msra.mxu0 %v449
    %468 = vmatprep.subr.bf16.mxu0 0
    %469 = vmatpush1.bf16.msra.mxu0 %v450
    %470 = vmatprep.subr.bf16.mxu0 0
    %471 = vmatpush1.bf16.msra.mxu0 %v451
    %472 = vmatprep.subr.bf16.mxu0 0
    %473 = vmatpush1.bf16.msra.mxu0 %v452
    %474 = vmatprep.subr.bf16.mxu0 0
    %475 = vmatpush1.bf16.msra.mxu0 0
    %476 = vmatprep.subr.bf16.mxu0 0
    %477 = vmatpush1.bf16.msra.mxu0 0
    %478 = vmatprep.subr.bf16.mxu0 0
    %479 = vmatpush1.bf16.msra.mxu0 0
    %480 = vmatprep.subr.bf16.mxu0 0
    %481 = vmatpush1.bf16.msra.mxu0 0
    %482 = vmatprep.subr.bf16.mxu0 0
    %483 = vmatpush1.bf16.msra.mxu0 0
    %484 = vmatprep.subr.bf16.mxu0 0
    %485 = vmatpush1.bf16.msra.mxu0 0
    %486 = vmatprep.subr.bf16.mxu0 0
    %487 = vmatpush1.bf16.msra.mxu0 0
    %488 = vmatprep.subr.bf16.mxu0 0
    %489 = vmatpush1.bf16.msra.mxu0 0
    %490 = vmatprep.subr.bf16.mxu0 0
    %491 = vmatpush1.bf16.msra.mxu0 0
    %492 = vmatprep.subr.bf16.mxu0 0
    %493 = vmatpush1.bf16.msra.mxu0 0
    %494 = vmatprep.subr.bf16.mxu0 0
    %495 = vmatpush1.bf16.msra.mxu0 0
    %496 = vmatprep.subr.bf16.mxu0 0
    %497 = vmatpush1.bf16.msra.mxu0 0
    %498 = vmatprep.mubr.bf16.mxu0 0
    %499 = vmatmul.mubr.bf16.gmra.mrb[0].mxu0 %v458
    %v500 = vpop.f32.mrb[0].mxu0
    %v501 = vadd.f32 0.0, %v500
    %v502 = vpop.f32.mrb[0].mxu0
    %v503 = vpop.f32.mrb[0].mxu0
    %v504 = vadd.f32 0.0, %v503
    %v505 = vpop.f32.mrb[0].mxu0
    %506 = vmatprep.mubr.bf16.mxu0 0
    %507 = vmatmul.mubr.bf16.gmra.mrb[0].mxu0 %v461
    %v508 = vpop.f32.mrb[0].mxu0
    %v509 = vpop.f32.mrb[0].mxu0
    %v510 = vpop.f32.mrb[0].mxu0
    %v511 = vadd.f32 0.0, %v510
    %v512 = vpop.f32.mrb[0].mxu0
    %513 = vmatprep.mubr.bf16.mxu0 0
    %514 = vmatmul.mubr.bf16.gmra.mrb[0].mxu0 %v464
    %v515 = vpop.f32.mrb[0].mxu0
    %v516 = vadd.f32 0.0, %v515
    %v517 = vpop.f32.mrb[0].mxu0
    %v518 = vpop.f32.mrb[0].mxu0
    %v519 = vpop.f32.mrb[0].mxu0
    %520 = vdwg.mxu0
    %v521 = vadd.f32 %v397, %v501
    %v522 = vadd.f32 %v398, %v504
    %v523 = vadd.f32 %v399, %v511
    %v524 = vadd.f32 %v400, %v516
    %v525 = vld [vmem:[#allocation2] sm:$0xfc]
    %s526 = scalar_lea.vmem [#allocation4], 128
    %v527 = vld [vmem:[%s526] sm:$0xf]
    %v528 = vld [vmem:[%s526 + $0x4] sm:$0xf]
    %v529 = vld [vmem:[%s526 + $0x8] sm:$0xf]
    %v530 = vld [vmem:[%s526 + $0xc] sm:$0xf]
    %v531 = vld [vmem:[%s526 + $0x10] sm:$0xf]
    %v532 = vld [vmem:[%s526 + $0x14] sm:$0xf]
    %v533 = vld [vmem:[%s526 + $0x18] sm:$0xf]
    %v534 = vld [vmem:[%s526 + $0x1c] sm:$0xf]
    %vm537 = vcmask 1045504
    %v538 = vrot.slane %v525, 2
    %v539 = vrot.slane %v71, 2
    %v540 = vsel %vm537, %v538, %v539
    %v541 = vrot.slane %v401, 2
    %v542 = vsel %vm537, %v539, %v541
    %v551 = vunpack.c.l.b16 %v527
    %v552 = vunpack.c.l.b16 %v528
    %v553 = vunpack.c.l.b16 %v529
    %v554 = vunpack.c.l.b16 %v530
    %v555 = vunpack.c.l.b16 %v531
    %v556 = vunpack.c.l.b16 %v532
    %v557 = vunpack.c.l.b16 %v533
    %v558 = vunpack.c.l.b16 %v534
    %v559 = vpack.c.b16 %v552, %v551
    %v560 = vpack.c.b16 %v554, %v553
    %v561 = vpack.c.b16 %v556, %v555
    %v562 = vpack.c.b16 %v558, %v557
    %v568 = vsel %vm139, %v540, 0
    %v571 = vsel %vm139, %v542, 0
    %v574 = vsel %vm139, %v541, 0
    %576 = vmatprep.subr.bf16.mxu0 0
    %577 = vmatpush1.bf16.msra.mxu0 %v559
    %578 = vmatprep.subr.bf16.mxu0 0
    %579 = vmatpush1.bf16.msra.mxu0 %v560
    %580 = vmatprep.subr.bf16.mxu0 0
    %581 = vmatpush1.bf16.msra.mxu0 %v561
    %582 = vmatprep.subr.bf16.mxu0 0
    %583 = vmatpush1.bf16.msra.mxu0 %v562
    %584 = vmatprep.subr.bf16.mxu0 0
    %585 = vmatpush1.bf16.msra.mxu0 0
    %586 = vmatprep.subr.bf16.mxu0 0
    %587 = vmatpush1.bf16.msra.mxu0 0
    %588 = vmatprep.subr.bf16.mxu0 0
    %589 = vmatpush1.bf16.msra.mxu0 0
    %590 = vmatprep.subr.bf16.mxu0 0
    %591 = vmatpush1.bf16.msra.mxu0 0
    %592 = vmatprep.subr.bf16.mxu0 0
    %593 = vmatpush1.bf16.msra.mxu0 0
    %594 = vmatprep.subr.bf16.mxu0 0
    %595 = vmatpush1.bf16.msra.mxu0 0
    %596 = vmatprep.subr.bf16.mxu0 0
    %597 = vmatpush1.bf16.msra.mxu0 0
    %598 = vmatprep.subr.bf16.mxu0 0
    %599 = vmatpush1.bf16.msra.mxu0 0
    %600 = vmatprep.subr.bf16.mxu0 0
    %601 = vmatpush1.bf16.msra.mxu0 0
    %602 = vmatprep.subr.bf16.mxu0 0
    %603 = vmatpush1.bf16.msra.mxu0 0
    %604 = vmatprep.subr.bf16.mxu0 0
    %605 = vmatpush1.bf16.msra.mxu0 0
    %606 = vmatprep.subr.bf16.mxu0 0
    %607 = vmatpush1.bf16.msra.mxu0 0
    %608 = vmatprep.mubr.bf16.mxu0 0
    %609 = vmatmul.mubr.bf16.gmra.mrb[0].mxu0 %v568
    %v610 = vpop.f32.mrb[0].mxu0
    %v611 = vadd.f32 0.0, %v610
    %v612 = vpop.f32.mrb[0].mxu0
    %v613 = vpop.f32.mrb[0].mxu0
    %v614 = vadd.f32 0.0, %v613
    %v615 = vpop.f32.mrb[0].mxu0
    %616 = vmatprep.mubr.bf16.mxu0 0
    %617 = vmatmul.mubr.bf16.gmra.mrb[0].mxu0 %v571
    %v618 = vpop.f32.mrb[0].mxu0
    %v619 = vpop.f32.mrb[0].mxu0
    %v620 = vpop.f32.mrb[0].mxu0
    %v621 = vadd.f32 0.0, %v620
    %v622 = vpop.f32.mrb[0].mxu0
    %623 = vmatprep.mubr.bf16.mxu0 0
    %624 = vmatmul.mubr.bf16.gmra.mrb[0].mxu0 %v574
    %v625 = vpop.f32.mrb[0].mxu0
    %v626 = vadd.f32 0.0, %v625
    %v627 = vpop.f32.mrb[0].mxu0
    %v628 = vpop.f32.mrb[0].mxu0
    %v629 = vpop.f32.mrb[0].mxu0
    %630 = vdwg.mxu0
    %v631 = vadd.f32 %v521, %v611
    %v632 = vadd.f32 %v522, %v614
    %v633 = vadd.f32 %v523, %v621
    %v634 = vadd.f32 %v524, %v626
    %v635 = vld [vmem:[%s2] sm:$0x1]
    %v637 = vlaneseq
    %v638 = vshrl.u32 %v637, 7
    %v639 = vsub.s32 0, %v638
    %v640 = vrot.slane %v635, %v639
    %v642 = vadd.f32 %v631, %v640
    %v643 = vadd.f32 %v632, %v640
    %v644 = vadd.f32 %v633, %v640
    %v645 = vadd.f32 %v634, %v640
    %v646 = vmax.f32 %v642, 0.0
    %v647 = vmax.f32 %v643, 0.0
    %v648 = vmax.f32 %v644, 0.0
    %v649 = vmax.f32 %v645, 0.0
    %v650 = vpack.c.bf16 %v647, %v646
    %v652 = vrot.slane %v650, 7
    %654 = vst [vmem:[#allocation3] sm:$0xfe] %v652
    %655 = vst [vmem:[#allocation3 + $0x8] sm:$0x1] %v652
    %v656 = vpack.c.bf16 %v649, %v648
    %v658 = vrot.slane %v656, 3
    %660 = vst [vmem:[#allocation3 + $0x8] sm:$0xe0] %v658
    %661 = vst [vmem:[#allocation3 + $0x10] sm:$0x1f] %v658
    %v662 = vld [vmem:[#allocation3] sm:$0xff]
    %v663 = vld [vmem:[#allocation3 + $0x8] sm:$0xff]
    %v664 = vld [vmem:[#allocation3 + $0x10] sm:$0xf]
    %v665 = vld [vmem:[%s3] sm:$0xf]
    %v666 = vld [vmem:[%s3 + $0x4] sm:$0xf]
    %v667 = vld [vmem:[%s3 + $0x8] sm:$0xf]
    %v668 = vld [vmem:[%s3 + $0xc] sm:$0xf]
    %v669 = vld [vmem:[%s3 + $0x10] sm:$0xf]
    %v670 = vld [vmem:[%s3 + $0x14] sm:$0xf]
    %v671 = vld [vmem:[%s3 + $0x18] sm:$0xf]
    %v672 = vld [vmem:[%s3 + $0x1c] sm:$0xf]
    %v673 = vld [vmem:[%s3 + $0x20] sm:$0xf]
    %v674 = vld [vmem:[%s3 + $0x24] sm:$0xf]
    %v675 = vld [vmem:[%s3 + $0x28] sm:$0xf]
    %v676 = vld [vmem:[%s3 + $0x2c] sm:$0xf]
    %v677 = vld [vmem:[%s3 + $0x30] sm:$0xf]
    %v678 = vld [vmem:[%s3 + $0x34] sm:$0xf]
    %v679 = vld [vmem:[%s3 + $0x38] sm:$0xf]
    %v680 = vld [vmem:[%s3 + $0x3c] sm:$0xf]
    %v681 = vld [vmem:[#allocation3 + $0x10] sm:$0x1f]
    %s682 = scalar_lea.vmem %s3, 64
    %v683 = vld [vmem:[%s682] sm:$0xf]
    %v684 = vld [vmem:[%s682 + $0x4] sm:$0xf]
    %v685 = vld [vmem:[%s682 + $0x8] sm:$0xf]
    %v686 = vld [vmem:[%s682 + $0xc] sm:$0xf]
    %v687 = vld [vmem:[%s682 + $0x10] sm:$0xf]
    %v688 = vld [vmem:[%s682 + $0x14] sm:$0xf]
    %v689 = vld [vmem:[%s682 + $0x18] sm:$0xf]
    %v690 = vld [vmem:[%s682 + $0x1c] sm:$0xf]
    %v691 = vld [vmem:[%s682 + $0x20] sm:$0xf]
    %v692 = vld [vmem:[%s682 + $0x24] sm:$0xf]
    %v693 = vld [vmem:[%s682 + $0x28] sm:$0xf]
    %v694 = vld [vmem:[%s682 + $0x2c] sm:$0xf]
    %v695 = vld [vmem:[%s682 + $0x30] sm:$0xf]
    %v696 = vld [vmem:[%s682 + $0x34] sm:$0xf]
    %v697 = vld [vmem:[%s682 + $0x38] sm:$0xf]
    %v698 = vld [vmem:[%s682 + $0x3c] sm:$0xf]
    %v700 = vshrl.u32 %v662, 16
    %v702 = vshll.u32 %v662, 16
    %v704 = vrot.slane %v702, 1
    %v705 = vor.u32 %v700, %v704
    %v707 = vshll.u32 %v663, 16
    %v709 = vrot.slane %v707, 1
    %v710 = vsel %vm91, %v705, %v709
    %v711 = vshrl.u32 %v663, 16
    %v713 = vor.u32 %v711, %v709
    %v715 = vshll.u32 %v681, 16
    %v717 = vrot.slane %v715, 1
    %v718 = vsel %vm91, %v713, %v717
    %v719 = vshrl.u32 %v681, 16
    %v721 = vor.u32 %v719, %v717
    %v741 = vunpack.c.l.b16 %v683
    %v742 = vunpack.c.l.b16 %v684
    %v743 = vunpack.c.l.b16 %v685
    %v744 = vunpack.c.l.b16 %v686
    %v745 = vunpack.c.l.b16 %v687
    %v746 = vunpack.c.l.b16 %v688
    %v747 = vunpack.c.l.b16 %v689
    %v748 = vunpack.c.l.b16 %v690
    %v749 = vunpack.c.l.b16 %v691
    %v750 = vunpack.c.l.b16 %v692
    %v751 = vunpack.c.l.b16 %v693
    %v752 = vunpack.c.l.b16 %v694
    %v753 = vunpack.c.l.b16 %v695
    %v754 = vunpack.c.l.b16 %v696
    %v755 = vunpack.c.l.b16 %v697
    %v756 = vunpack.c.l.b16 %v698
    %v757 = vpack.c.b16 %v742, %v741
    %v758 = vpack.c.b16 %v744, %v743
    %v759 = vpack.c.b16 %v746, %v745
    %v760 = vpack.c.b16 %v748, %v747
    %v761 = vpack.c.b16 %v750, %v749
    %v762 = vpack.c.b16 %v752, %v751
    %v763 = vpack.c.b16 %v754, %v753
    %v764 = vpack.c.b16 %v756, %v755
    %773 = vmatprep.subr.bf16.mxu0 0
    %774 = vmatpush1.bf16.msra.mxu0 %v757
    %775 = vmatprep.subr.bf16.mxu0 0
    %776 = vmatpush1.bf16.msra.mxu0 %v758
    %777 = vmatprep.subr.bf16.mxu0 0
    %778 = vmatpush1.bf16.msra.mxu0 %v759
    %779 = vmatprep.subr.bf16.mxu0 0
    %780 = vmatpush1.bf16.msra.mxu0 %v760
    %781 = vmatprep.subr.bf16.mxu0 0
    %782 = vmatpush1.bf16.msra.mxu0 %v761
    %783 = vmatprep.subr.bf16.mxu0 0
    %784 = vmatpush1.bf16.msra.mxu0 %v762
    %785 = vmatprep.subr.bf16.mxu0 0
    %786 = vmatpush1.bf16.msra.mxu0 %v763
    %787 = vmatprep.subr.bf16.mxu0 0
    %788 = vmatpush1.bf16.msra.mxu0 %v764
    %789 = vmatprep.subr.bf16.mxu0 0
    %790 = vmatpush1.bf16.msra.mxu0 0
    %791 = vmatprep.subr.bf16.mxu0 0
    %792 = vmatpush1.bf16.msra.mxu0 0
    %793 = vmatprep.subr.bf16.mxu0 0
    %794 = vmatpush1.bf16.msra.mxu0 0
    %795 = vmatprep.subr.bf16.mxu0 0
    %796 = vmatpush1.bf16.msra.mxu0 0
    %797 = vmatprep.subr.bf16.mxu0 0
    %798 = vmatpush1.bf16.msra.mxu0 0
    %799 = vmatprep.subr.bf16.mxu0 0
    %800 = vmatpush1.bf16.msra.mxu0 0
    %801 = vmatprep.subr.bf16.mxu0 0
    %802 = vmatpush1.bf16.msra.mxu0 0
    %803 = vmatprep.subr.bf16.mxu0 0
    %804 = vmatpush1.bf16.msra.mxu0 0
    %805 = vmatprep.mubr.bf16.mxu0 0
    %806 = vmatmul.mubr.bf16.gmra.mrb[0].mxu0 %v710
    %v807 = vpop.f32.mrb[0].mxu0
    %v808 = vadd.f32 0.0, %v807
    %v809 = vpop.f32.mrb[0].mxu0
    %v810 = vpop.f32.mrb[0].mxu0
    %v811 = vadd.f32 0.0, %v810
    %v812 = vpop.f32.mrb[0].mxu0
    %813 = vmatprep.mubr.bf16.mxu0 0
    %814 = vmatmul.mubr.bf16.gmra.mrb[0].mxu0 %v718
    %v815 = vpop.f32.mrb[0].mxu0
    %v816 = vpop.f32.mrb[0].mxu0
    %v817 = vpop.f32.mrb[0].mxu0
    %v818 = vadd.f32 0.0, %v817
    %v819 = vpop.f32.mrb[0].mxu0
    %820 = vmatprep.mubr.bf16.mxu0 0
    %821 = vmatmul.mubr.bf16.gmra.mrb[0].mxu0 %v721
    %v822 = vpop.f32.mrb[0].mxu0
    %v823 = vadd.f32 0.0, %v822
    %v824 = vpop.f32.mrb[0].mxu0
    %v825 = vpop.f32.mrb[0].mxu0
    %v826 = vpop.f32.mrb[0].mxu0
    %827 = vdwg.mxu0
    %v844 = vunpack.c.l.b16 %v665
    %v845 = vunpack.c.l.b16 %v666
    %v846 = vunpack.c.l.b16 %v667
    %v847 = vunpack.c.l.b16 %v668
    %v848 = vunpack.c.l.b16 %v669
    %v849 = vunpack.c.l.b16 %v670
    %v850 = vunpack.c.l.b16 %v671
    %v851 = vunpack.c.l.b16 %v672
    %v852 = vunpack.c.l.b16 %v673
    %v853 = vunpack.c.l.b16 %v674
    %v854 = vunpack.c.l.b16 %v675
    %v855 = vunpack.c.l.b16 %v676
    %v856 = vunpack.c.l.b16 %v677
    %v857 = vunpack.c.l.b16 %v678
    %v858 = vunpack.c.l.b16 %v679
    %v859 = vunpack.c.l.b16 %v680
    %v860 = vpack.c.b16 %v845, %v844
    %v861 = vpack.c.b16 %v847, %v846
    %v862 = vpack.c.b16 %v849, %v848
    %v863 = vpack.c.b16 %v851, %v850
    %v864 = vpack.c.b16 %v853, %v852
    %v865 = vpack.c.b16 %v855, %v854
    %v866 = vpack.c.b16 %v857, %v856
    %v867 = vpack.c.b16 %v859, %v858
    %876 = vmatprep.subr.bf16.mxu0 0
    %877 = vmatpush1.bf16.msra.mxu0 %v860
    %878 = vmatprep.subr.bf16.mxu0 0
    %879 = vmatpush1.bf16.msra.mxu0 %v861
    %880 = vmatprep.subr.bf16.mxu0 0
    %881 = vmatpush1.bf16.msra.mxu0 %v862
    %882 = vmatprep.subr.bf16.mxu0 0
    %883 = vmatpush1.bf16.msra.mxu0 %v863
    %884 = vmatprep.subr.bf16.mxu0 0
    %885 = vmatpush1.bf16.msra.mxu0 %v864
    %886 = vmatprep.subr.bf16.mxu0 0
    %887 = vmatpush1.bf16.msra.mxu0 %v865
    %888 = vmatprep.subr.bf16.mxu0 0
    %889 = vmatpush1.bf16.msra.mxu0 %v866
    %890 = vmatprep.subr.bf16.mxu0 0
    %891 = vmatpush1.bf16.msra.mxu0 %v867
    %892 = vmatprep.subr.bf16.mxu0 0
    %893 = vmatpush1.bf16.msra.mxu0 0
    %894 = vmatprep.subr.bf16.mxu0 0
    %895 = vmatpush1.bf16.msra.mxu0 0
    %896 = vmatprep.subr.bf16.mxu0 0
    %897 = vmatpush1.bf16.msra.mxu0 0
    %898 = vmatprep.subr.bf16.mxu0 0
    %899 = vmatpush1.bf16.msra.mxu0 0
    %900 = vmatprep.subr.bf16.mxu0 0
    %901 = vmatpush1.bf16.msra.mxu0 0
    %902 = vmatprep.subr.bf16.mxu0 0
    %903 = vmatpush1.bf16.msra.mxu0 0
    %904 = vmatprep.subr.bf16.mxu0 0
    %905 = vmatpush1.bf16.msra.mxu0 0
    %906 = vmatprep.subr.bf16.mxu0 0
    %907 = vmatpush1.bf16.msra.mxu0 0
    %908 = vmatprep.mubr.bf16.mxu0 0
    %909 = vmatmul.mubr.bf16.gmra.mrb[0].mxu0 %v662
    %v910 = vpop.f32.mrb[0].mxu0
    %v911 = vadd.f32 %v808, %v910
    %v912 = vpop.f32.mrb[0].mxu0
    %v913 = vpop.f32.mrb[0].mxu0
    %v914 = vadd.f32 %v811, %v913
    %v915 = vpop.f32.mrb[0].mxu0
    %916 = vmatprep.mubr.bf16.mxu0 0
    %917 = vmatmul.mubr.bf16.gmra.mrb[0].mxu0 %v663
    %v918 = vpop.f32.mrb[0].mxu0
    %v919 = vpop.f32.mrb[0].mxu0
    %v920 = vpop.f32.mrb[0].mxu0
    %v921 = vadd.f32 %v818, %v920
    %v922 = vpop.f32.mrb[0].mxu0
    %923 = vmatprep.mubr.bf16.mxu0 0
    %924 = vmatmul.mubr.bf16.gmra.mrb[0].mxu0 %v664
    %v925 = vpop.f32.mrb[0].mxu0
    %v926 = vadd.f32 %v823, %v925
    %v927 = vpop.f32.mrb[0].mxu0
    %v928 = vpop.f32.mrb[0].mxu0
    %v929 = vpop.f32.mrb[0].mxu0
    %930 = vdwg.mxu0
    %v931 = vld [vmem:[#allocation3] sm:$0xfe]
    %s932 = scalar_lea.vmem %s3, 128
    %v933 = vld [vmem:[%s932] sm:$0xf]
    %v934 = vld [vmem:[%s932 + $0x4] sm:$0xf]
    %v935 = vld [vmem:[%s932 + $0x8] sm:$0xf]
    %v936 = vld [vmem:[%s932 + $0xc] sm:$0xf]
    %v937 = vld [vmem:[%s932 + $0x10] sm:$0xf]
    %v938 = vld [vmem:[%s932 + $0x14] sm:$0xf]
    %v939 = vld [vmem:[%s932 + $0x18] sm:$0xf]
    %v940 = vld [vmem:[%s932 + $0x1c] sm:$0xf]
    %v941 = vld [vmem:[%s932 + $0x20] sm:$0xf]
    %v942 = vld [vmem:[%s932 + $0x24] sm:$0xf]
    %v943 = vld [vmem:[%s932 + $0x28] sm:$0xf]
    %v944 = vld [vmem:[%s932 + $0x2c] sm:$0xf]
    %v945 = vld [vmem:[%s932 + $0x30] sm:$0xf]
    %v946 = vld [vmem:[%s932 + $0x34] sm:$0xf]
    %v947 = vld [vmem:[%s932 + $0x38] sm:$0xf]
    %v948 = vld [vmem:[%s932 + $0x3c] sm:$0xf]
    %v952 = vrot.slane %v931, 1
    %v953 = vrot.slane %v663, 1
    %v954 = vsel %vm303, %v952, %v953
    %v955 = vrot.slane %v681, 1
    %v956 = vsel %vm303, %v953, %v955
    %v976 = vunpack.c.l.b16 %v933
    %v977 = vunpack.c.l.b16 %v934
    %v978 = vunpack.c.l.b16 %v935
    %v979 = vunpack.c.l.b16 %v936
    %v980 = vunpack.c.l.b16 %v937
    %v981 = vunpack.c.l.b16 %v938
    %v982 = vunpack.c.l.b16 %v939
    %v983 = vunpack.c.l.b16 %v940
    %v984 = vunpack.c.l.b16 %v941
    %v985 = vunpack.c.l.b16 %v942
    %v986 = vunpack.c.l.b16 %v943
    %v987 = vunpack.c.l.b16 %v944
    %v988 = vunpack.c.l.b16 %v945
    %v989 = vunpack.c.l.b16 %v946
    %v990 = vunpack.c.l.b16 %v947
    %v991 = vunpack.c.l.b16 %v948
    %v992 = vpack.c.b16 %v977, %v976
    %v993 = vpack.c.b16 %v979, %v978
    %v994 = vpack.c.b16 %v981, %v980
    %v995 = vpack.c.b16 %v983, %v982
    %v996 = vpack.c.b16 %v985, %v984
    %v997 = vpack.c.b16 %v987, %v986
    %v998 = vpack.c.b16 %v989, %v988
    %v999 = vpack.c.b16 %v991, %v990
    %1008 = vmatprep.subr.bf16.mxu0 0
    %1009 = vmatpush1.bf16.msra.mxu0 %v992
    %1010 = vmatprep.subr.bf16.mxu0 0
    %1011 = vmatpush1.bf16.msra.mxu0 %v993
    %1012 = vmatprep.subr.bf16.mxu0 0
    %1013 = vmatpush1.bf16.msra.mxu0 %v994
    %1014 = vmatprep.subr.bf16.mxu0 0
    %1015 = vmatpush1.bf16.msra.mxu0 %v995
    %1016 = vmatprep.subr.bf16.mxu0 0
    %1017 = vmatpush1.bf16.msra.mxu0 %v996
    %1018 = vmatprep.subr.bf16.mxu0 0
    %1019 = vmatpush1.bf16.msra.mxu0 %v997
    %1020 = vmatprep.subr.bf16.mxu0 0
    %1021 = vmatpush1.bf16.msra.mxu0 %v998
    %1022 = vmatprep.subr.bf16.mxu0 0
    %1023 = vmatpush1.bf16.msra.mxu0 %v999
    %1024 = vmatprep.subr.bf16.mxu0 0
    %1025 = vmatpush1.bf16.msra.mxu0 0
    %1026 = vmatprep.subr.bf16.mxu0 0
    %1027 = vmatpush1.bf16.msra.mxu0 0
    %1028 = vmatprep.subr.bf16.mxu0 0
    %1029 = vmatpush1.bf16.msra.mxu0 0
    %1030 = vmatprep.subr.bf16.mxu0 0
    %1031 = vmatpush1.bf16.msra.mxu0 0
    %1032 = vmatprep.subr.bf16.mxu0 0
    %1033 = vmatpush1.bf16.msra.mxu0 0
    %1034 = vmatprep.subr.bf16.mxu0 0
    %1035 = vmatpush1.bf16.msra.mxu0 0
    %1036 = vmatprep.subr.bf16.mxu0 0
    %1037 = vmatpush1.bf16.msra.mxu0 0
    %1038 = vmatprep.subr.bf16.mxu0 0
    %1039 = vmatpush1.bf16.msra.mxu0 0
    %1040 = vmatprep.mubr.bf16.mxu0 0
    %1041 = vmatmul.mubr.bf16.gmra.mrb[0].mxu0 %v954
    %v1042 = vpop.f32.mrb[0].mxu0
    %v1043 = vadd.f32 0.0, %v1042
    %v1044 = vpop.f32.mrb[0].mxu0
    %v1045 = vpop.f32.mrb[0].mxu0
    %v1046 = vadd.f32 0.0, %v1045
    %v1047 = vpop.f32.mrb[0].mxu0
    %1048 = vmatprep.mubr.bf16.mxu0 0
    %1049 = vmatmul.mubr.bf16.gmra.mrb[0].mxu0 %v956
    %v1050 = vpop.f32.mrb[0].mxu0
    %v1051 = vpop.f32.mrb[0].mxu0
    %v1052 = vpop.f32.mrb[0].mxu0
    %v1053 = vadd.f32 0.0, %v1052
    %v1054 = vpop.f32.mrb[0].mxu0
    %1055 = vmatprep.mubr.bf16.mxu0 0
    %1056 = vmatmul.mubr.bf16.gmra.mrb[0].mxu0 %v955
    %v1057 = vpop.f32.mrb[0].mxu0
    %v1058 = vadd.f32 0.0, %v1057
    %v1059 = vpop.f32.mrb[0].mxu0
    %v1060 = vpop.f32.mrb[0].mxu0
    %v1061 = vpop.f32.mrb[0].mxu0
    %1062 = vdwg.mxu0
    %v1063 = vadd.f32 %v911, %v1043
    %v1064 = vadd.f32 %v914, %v1046
    %v1065 = vadd.f32 %v921, %v1053
    %v1066 = vadd.f32 %v926, %v1058
    %v1067 = vld [vmem:[#allocation3 + $0x10] sm:$0x3f]
    %s1068 = scalar_lea.vmem %s3, 192
    %v1069 = vld [vmem:[%s1068] sm:$0xf]
    %v1070 = vld [vmem:[%s1068 + $0x4] sm:$0xf]
    %v1071 = vld [vmem:[%s1068 + $0x8] sm:$0xf]
    %v1072 = vld [vmem:[%s1068 + $0xc] sm:$0xf]
    %v1073 = vld [vmem:[%s1068 + $0x10] sm:$0xf]
    %v1074 = vld [vmem:[%s1068 + $0x14] sm:$0xf]
    %v1075 = vld [vmem:[%s1068 + $0x18] sm:$0xf]
    %v1076 = vld [vmem:[%s1068 + $0x1c] sm:$0xf]
    %v1077 = vld [vmem:[%s1068 + $0x20] sm:$0xf]
    %v1078 = vld [vmem:[%s1068 + $0x24] sm:$0xf]
    %v1079 = vld [vmem:[%s1068 + $0x28] sm:$0xf]
    %v1080 = vld [vmem:[%s1068 + $0x2c] sm:$0xf]
    %v1081 = vld [vmem:[%s1068 + $0x30] sm:$0xf]
    %v1082 = vld [vmem:[%s1068 + $0x34] sm:$0xf]
    %v1083 = vld [vmem:[%s1068 + $0x38] sm:$0xf]
    %v1084 = vld [vmem:[%s1068 + $0x3c] sm:$0xf]
    %v1086 = vshrl.u32 %v931, 16
    %v1088 = vrot.slane %v1086, 1
    %v1089 = vshll.u32 %v931, 16
    %v1091 = vrot.slane %v1089, 2
    %v1092 = vor.u32 %v1088, %v1091
    %v1093 = vrot.slane %v711, 1
    %v1094 = vrot.slane %v707, 2
    %v1095 = vor.u32 %v1093, %v1094
    %v1096 = vsel %vm411, %v1092, %v1095
    %v1098 = vshrl.u32 %v1067, 16
    %v1100 = vrot.slane %v1098, 1
    %v1101 = vshll.u32 %v1067, 16
    %v1103 = vrot.slane %v1101, 2
    %v1104 = vor.u32 %v1100, %v1103
    %v1105 = vsel %vm411, %v1095, %v1104
    %v1125 = vunpack.c.l.b16 %v1069
    %v1126 = vunpack.c.l.b16 %v1070
    %v1127 = vunpack.c.l.b16 %v1071
    %v1128 = vunpack.c.l.b16 %v1072
    %v1129 = vunpack.c.l.b16 %v1073
    %v1130 = vunpack.c.l.b16 %v1074
    %v1131 = vunpack.c.l.b16 %v1075
    %v1132 = vunpack.c.l.b16 %v1076
    %v1133 = vunpack.c.l.b16 %v1077
    %v1134 = vunpack.c.l.b16 %v1078
    %v1135 = vunpack.c.l.b16 %v1079
    %v1136 = vunpack.c.l.b16 %v1080
    %v1137 = vunpack.c.l.b16 %v1081
    %v1138 = vunpack.c.l.b16 %v1082
    %v1139 = vunpack.c.l.b16 %v1083
    %v1140 = vunpack.c.l.b16 %v1084
    %v1141 = vpack.c.b16 %v1126, %v1125
    %v1142 = vpack.c.b16 %v1128, %v1127
    %v1143 = vpack.c.b16 %v1130, %v1129
    %v1144 = vpack.c.b16 %v1132, %v1131
    %v1145 = vpack.c.b16 %v1134, %v1133
    %v1146 = vpack.c.b16 %v1136, %v1135
    %v1147 = vpack.c.b16 %v1138, %v1137
    %v1148 = vpack.c.b16 %v1140, %v1139
    %1157 = vmatprep.subr.bf16.mxu0 0
    %1158 = vmatpush1.bf16.msra.mxu0 %v1141
    %1159 = vmatprep.subr.bf16.mxu0 0
    %1160 = vmatpush1.bf16.msra.mxu0 %v1142
    %1161 = vmatprep.subr.bf16.mxu0 0
    %1162 = vmatpush1.bf16.msra.mxu0 %v1143
    %1163 = vmatprep.subr.bf16.mxu0 0
    %1164 = vmatpush1.bf16.msra.mxu0 %v1144
    %1165 = vmatprep.subr.bf16.mxu0 0
    %1166 = vmatpush1.bf16.msra.mxu0 %v1145
    %1167 = vmatprep.subr.bf16.mxu0 0
    %1168 = vmatpush1.bf16.msra.mxu0 %v1146
    %1169 = vmatprep.subr.bf16.mxu0 0
    %1170 = vmatpush1.bf16.msra.mxu0 %v1147
    %1171 = vmatprep.subr.bf16.mxu0 0
    %1172 = vmatpush1.bf16.msra.mxu0 %v1148
    %1173 = vmatprep.subr.bf16.mxu0 0
    %1174 = vmatpush1.bf16.msra.mxu0 0
    %1175 = vmatprep.subr.bf16.mxu0 0
    %1176 = vmatpush1.bf16.msra.mxu0 0
    %1177 = vmatprep.subr.bf16.mxu0 0
    %1178 = vmatpush1.bf16.msra.mxu0 0
    %1179 = vmatprep.subr.bf16.mxu0 0
    %1180 = vmatpush1.bf16.msra.mxu0 0
    %1181 = vmatprep.subr.bf16.mxu0 0
    %1182 = vmatpush1.bf16.msra.mxu0 0
    %1183 = vmatprep.subr.bf16.mxu0 0
    %1184 = vmatpush1.bf16.msra.mxu0 0
    %1185 = vmatprep.subr.bf16.mxu0 0
    %1186 = vmatpush1.bf16.msra.mxu0 0
    %1187 = vmatprep.subr.bf16.mxu0 0
    %1188 = vmatpush1.bf16.msra.mxu0 0
    %1189 = vmatprep.mubr.bf16.mxu0 0
    %1190 = vmatmul.mubr.bf16.gmra.mrb[0].mxu0 %v1096
    %v1191 = vpop.f32.mrb[0].mxu0
    %v1192 = vadd.f32 0.0, %v1191
    %v1193 = vpop.f32.mrb[0].mxu0
    %v1194 = vpop.f32.mrb[0].mxu0
    %v1195 = vadd.f32 0.0, %v1194
    %v1196 = vpop.f32.mrb[0].mxu0
    %1197 = vmatprep.mubr.bf16.mxu0 0
    %1198 = vmatmul.mubr.bf16.gmra.mrb[0].mxu0 %v1105
    %v1199 = vpop.f32.mrb[0].mxu0
    %v1200 = vpop.f32.mrb[0].mxu0
    %v1201 = vpop.f32.mrb[0].mxu0
    %v1202 = vadd.f32 0.0, %v1201
    %v1203 = vpop.f32.mrb[0].mxu0
    %1204 = vmatprep.mubr.bf16.mxu0 0
    %1205 = vmatmul.mubr.bf16.gmra.mrb[0].mxu0 %v1104
    %v1206 = vpop.f32.mrb[0].mxu0
    %v1207 = vadd.f32 0.0, %v1206
    %v1208 = vpop.f32.mrb[0].mxu0
    %v1209 = vpop.f32.mrb[0].mxu0
    %v1210 = vpop.f32.mrb[0].mxu0
    %1211 = vdwg.mxu0
    %v1212 = vadd.f32 %v1063, %v1192
    %v1213 = vadd.f32 %v1064, %v1195
    %v1214 = vadd.f32 %v1065, %v1202
    %v1215 = vadd.f32 %v1066, %v1207
    %v1216 = vld [vmem:[#allocation3] sm:$0xfc]
    %s1217 = scalar_lea.vmem %s3, 256
    %v1218 = vld [vmem:[%s1217] sm:$0xf]
    %v1219 = vld [vmem:[%s1217 + $0x4] sm:$0xf]
    %v1220 = vld [vmem:[%s1217 + $0x8] sm:$0xf]
    %v1221 = vld [vmem:[%s1217 + $0xc] sm:$0xf]
    %v1222 = vld [vmem:[%s1217 + $0x10] sm:$0xf]
    %v1223 = vld [vmem:[%s1217 + $0x14] sm:$0xf]
    %v1224 = vld [vmem:[%s1217 + $0x18] sm:$0xf]
    %v1225 = vld [vmem:[%s1217 + $0x1c] sm:$0xf]
    %v1226 = vld [vmem:[%s1217 + $0x20] sm:$0xf]
    %v1227 = vld [vmem:[%s1217 + $0x24] sm:$0xf]
    %v1228 = vld [vmem:[%s1217 + $0x28] sm:$0xf]
    %v1229 = vld [vmem:[%s1217 + $0x2c] sm:$0xf]
    %v1230 = vld [vmem:[%s1217 + $0x30] sm:$0xf]
    %v1231 = vld [vmem:[%s1217 + $0x34] sm:$0xf]
    %v1232 = vld [vmem:[%s1217 + $0x38] sm:$0xf]
    %v1233 = vld [vmem:[%s1217 + $0x3c] sm:$0xf]
    %v1236 = vrot.slane %v1216, 2
    %v1237 = vrot.slane %v663, 2
    %v1238 = vsel %vm537, %v1236, %v1237
    %v1239 = vrot.slane %v1067, 2
    %v1240 = vsel %vm537, %v1237, %v1239
    %v1260 = vunpack.c.l.b16 %v1218
    %v1261 = vunpack.c.l.b16 %v1219
    %v1262 = vunpack.c.l.b16 %v1220
    %v1263 = vunpack.c.l.b16 %v1221
    %v1264 = vunpack.c.l.b16 %v1222
    %v1265 = vunpack.c.l.b16 %v1223
    %v1266 = vunpack.c.l.b16 %v1224
    %v1267 = vunpack.c.l.b16 %v1225
    %v1268 = vunpack.c.l.b16 %v1226
    %v1269 = vunpack.c.l.b16 %v1227
    %v1270 = vunpack.c.l.b16 %v1228
    %v1271 = vunpack.c.l.b16 %v1229
    %v1272 = vunpack.c.l.b16 %v1230
    %v1273 = vunpack.c.l.b16 %v1231
    %v1274 = vunpack.c.l.b16 %v1232
    %v1275 = vunpack.c.l.b16 %v1233
    %v1276 = vpack.c.b16 %v1261, %v1260
    %v1277 = vpack.c.b16 %v1263, %v1262
    %v1278 = vpack.c.b16 %v1265, %v1264
    %v1279 = vpack.c.b16 %v1267, %v1266
    %v1280 = vpack.c.b16 %v1269, %v1268
    %v1281 = vpack.c.b16 %v1271, %v1270
    %v1282 = vpack.c.b16 %v1273, %v1272
    %v1283 = vpack.c.b16 %v1275, %v1274
    %1292 = vmatprep.subr.bf16.mxu0 0
    %1293 = vmatpush1.bf16.msra.mxu0 %v1276
    %1294 = vmatprep.subr.bf16.mxu0 0
    %1295 = vmatpush1.bf16.msra.mxu0 %v1277
    %1296 = vmatprep.subr.bf16.mxu0 0
    %1297 = vmatpush1.bf16.msra.mxu0 %v1278
    %1298 = vmatprep.subr.bf16.mxu0 0
    %1299 = vmatpush1.bf16.msra.mxu0 %v1279
    %1300 = vmatprep.subr.bf16.mxu0 0
    %1301 = vmatpush1.bf16.msra.mxu0 %v1280
    %1302 = vmatprep.subr.bf16.mxu0 0
    %1303 = vmatpush1.bf16.msra.mxu0 %v1281
    %1304 = vmatprep.subr.bf16.mxu0 0
    %1305 = vmatpush1.bf16.msra.mxu0 %v1282
    %1306 = vmatprep.subr.bf16.mxu0 0
    %1307 = vmatpush1.bf16.msra.mxu0 %v1283
    %1308 = vmatprep.subr.bf16.mxu0 0
    %1309 = vmatpush1.bf16.msra.mxu0 0
    %1310 = vmatprep.subr.bf16.mxu0 0
    %1311 = vmatpush1.bf16.msra.mxu0 0
    %1312 = vmatprep.subr.bf16.mxu0 0
    %1313 = vmatpush1.bf16.msra.mxu0 0
    %1314 = vmatprep.subr.bf16.mxu0 0
    %1315 = vmatpush1.bf16.msra.mxu0 0
    %1316 = vmatprep.subr.bf16.mxu0 0
    %1317 = vmatpush1.bf16.msra.mxu0 0
    %1318 = vmatprep.subr.bf16.mxu0 0
    %1319 = vmatpush1.bf16.msra.mxu0 0
    %1320 = vmatprep.subr.bf16.mxu0 0
    %1321 = vmatpush1.bf16.msra.mxu0 0
    %1322 = vmatprep.subr.bf16.mxu0 0
    %1323 = vmatpush1.bf16.msra.mxu0 0
    %1324 = vmatprep.mubr.bf16.mxu0 0
    %1325 = vmatmul.mubr.bf16.gmra.mrb[0].mxu0 %v1238
    %v1326 = vpop.f32.mrb[0].mxu0
    %v1327 = vadd.f32 0.0, %v1326
    %v1328 = vpop.f32.mrb[0].mxu0
    %v1329 = vpop.f32.mrb[0].mxu0
    %v1330 = vadd.f32 0.0, %v1329
    %v1331 = vpop.f32.mrb[0].mxu0
    %1332 = vmatprep.mubr.bf16.mxu0 0
    %1333 = vmatmul.mubr.bf16.gmra.mrb[0].mxu0 %v1240
    %v1334 = vpop.f32.mrb[0].mxu0
    %v1335 = vpop.f32.mrb[0].mxu0
    %v1336 = vpop.f32.mrb[0].mxu0
    %v1337 = vadd.f32 0.0, %v1336
    %v1338 = vpop.f32.mrb[0].mxu0
    %1339 = vmatprep.mubr.bf16.mxu0 0
    %1340 = vmatmul.mubr.bf16.gmra.mrb[0].mxu0 %v1239
    %v1341 = vpop.f32.mrb[0].mxu0
    %v1342 = vadd.f32 0.0, %v1341
    %v1343 = vpop.f32.mrb[0].mxu0
    %v1344 = vpop.f32.mrb[0].mxu0
    %v1345 = vpop.f32.mrb[0].mxu0
    %1346 = vdwg.mxu0
    %v1347 = vadd.f32 %v1212, %v1327
    %v1348 = vadd.f32 %v1213, %v1330
    %v1349 = vadd.f32 %v1214, %v1337
    %v1350 = vadd.f32 %v1215, %v1342
    %v1351 = vld [vmem:[#allocation2] sm:$0xfe]
    %v1352 = vld [vmem:[#allocation2 + $0x8] sm:$0xff]
    %v1353 = vld [vmem:[#allocation2 + $0x10] sm:$0x1f]
    %v1354 = vld [vmem:[%s5] sm:$0xf]
    %v1355 = vld [vmem:[%s5 + $0x4] sm:$0xf]
    %v1356 = vld [vmem:[%s5 + $0x8] sm:$0xf]
    %v1357 = vld [vmem:[%s5 + $0xc] sm:$0xf]
    %v1358 = vld [vmem:[%s5 + $0x10] sm:$0xf]
    %v1359 = vld [vmem:[%s5 + $0x14] sm:$0xf]
    %v1360 = vld [vmem:[%s5 + $0x18] sm:$0xf]
    %v1361 = vld [vmem:[%s5 + $0x1c] sm:$0xf]
    %v1365 = vrot.slane %v1351, 1
    %v1366 = vrot.slane %v1352, 1
    %v1367 = vsel %vm303, %v1365, %v1366
    %v1368 = vrot.slane %v1353, 1
    %v1369 = vsel %vm303, %v1366, %v1368
    %v1378 = vunpack.c.l.b16 %v1354
    %v1379 = vunpack.c.l.b16 %v1355
    %v1380 = vunpack.c.l.b16 %v1356
    %v1381 = vunpack.c.l.b16 %v1357
    %v1382 = vunpack.c.l.b16 %v1358
    %v1383 = vunpack.c.l.b16 %v1359
    %v1384 = vunpack.c.l.b16 %v1360
    %v1385 = vunpack.c.l.b16 %v1361
    %v1386 = vpack.c.b16 %v1379, %v1378
    %v1387 = vpack.c.b16 %v1381, %v1380
    %v1388 = vpack.c.b16 %v1383, %v1382
    %v1389 = vpack.c.b16 %v1385, %v1384
    %v1395 = vsel %vm139, %v1367, 0
    %v1398 = vsel %vm139, %v1369, 0
    %v1401 = vsel %vm139, %v1368, 0
    %1403 = vmatprep.subr.bf16.mxu0 0
    %1404 = vmatpush1.bf16.msra.mxu0 %v1386
    %1405 = vmatprep.subr.bf16.mxu0 0
    %1406 = vmatpush1.bf16.msra.mxu0 %v1387
    %1407 = vmatprep.subr.bf16.mxu0 0
    %1408 = vmatpush1.bf16.msra.mxu0 %v1388
    %1409 = vmatprep.subr.bf16.mxu0 0
    %1410 = vmatpush1.bf16.msra.mxu0 %v1389
    %1411 = vmatprep.subr.bf16.mxu0 0
    %1412 = vmatpush1.bf16.msra.mxu0 0
    %1413 = vmatprep.subr.bf16.mxu0 0
    %1414 = vmatpush1.bf16.msra.mxu0 0
    %1415 = vmatprep.subr.bf16.mxu0 0
    %1416 = vmatpush1.bf16.msra.mxu0 0
    %1417 = vmatprep.subr.bf16.mxu0 0
    %1418 = vmatpush1.bf16.msra.mxu0 0
    %1419 = vmatprep.subr.bf16.mxu0 0
    %1420 = vmatpush1.bf16.msra.mxu0 0
    %1421 = vmatprep.subr.bf16.mxu0 0
    %1422 = vmatpush1.bf16.msra.mxu0 0
    %1423 = vmatprep.subr.bf16.mxu0 0
    %1424 = vmatpush1.bf16.msra.mxu0 0
    %1425 = vmatprep.subr.bf16.mxu0 0
    %1426 = vmatpush1.bf16.msra.mxu0 0
    %1427 = vmatprep.subr.bf16.mxu0 0
    %1428 = vmatpush1.bf16.msra.mxu0 0
    %1429 = vmatprep.subr.bf16.mxu0 0
    %1430 = vmatpush1.bf16.msra.mxu0 0
    %1431 = vmatprep.subr.bf16.mxu0 0
    %1432 = vmatpush1.bf16.msra.mxu0 0
    %1433 = vmatprep.subr.bf16.mxu0 0
    %1434 = vmatpush1.bf16.msra.mxu0 0
    %1435 = vmatprep.mubr.bf16.mxu0 0
    %1436 = vmatmul.mubr.bf16.gmra.mrb[0].mxu0 %v1395
    %v1437 = vpop.f32.mrb[0].mxu0
    %v1438 = vadd.f32 0.0, %v1437
    %v1439 = vpop.f32.mrb[0].mxu0
    %v1440 = vpop.f32.mrb[0].mxu0
    %v1441 = vadd.f32 0.0, %v1440
    %v1442 = vpop.f32.mrb[0].mxu0
    %1443 = vmatprep.mubr.bf16.mxu0 0
    %1444 = vmatmul.mubr.bf16.gmra.mrb[0].mxu0 %v1398
    %v1445 = vpop.f32.mrb[0].mxu0
    %v1446 = vpop.f32.mrb[0].mxu0
    %v1447 = vpop.f32.mrb[0].mxu0
    %v1448 = vadd.f32 0.0, %v1447
    %v1449 = vpop.f32.mrb[0].mxu0
    %1450 = vmatprep.mubr.bf16.mxu0 0
    %1451 = vmatmul.mubr.bf16.gmra.mrb[0].mxu0 %v1401
    %v1452 = vpop.f32.mrb[0].mxu0
    %v1453 = vadd.f32 0.0, %v1452
    %v1454 = vpop.f32.mrb[0].mxu0
    %v1455 = vpop.f32.mrb[0].mxu0
    %v1456 = vpop.f32.mrb[0].mxu0
    %1457 = vdwg.mxu0
    %v1458 = vadd.f32 %v1347, %v1438
    %v1459 = vadd.f32 %v1348, %v1441
    %v1460 = vadd.f32 %v1349, %v1448
    %v1461 = vadd.f32 %v1350, %v1453
    %v1462 = vld [vmem:[%s4] sm:$0x1]
    %v1464 = vlaneseq
    %v1465 = vshrl.u32 %v1464, 7
    %v1466 = vsub.s32 0, %v1465
    %v1467 = vrot.slane %v1462, %v1466
    %v1469 = vadd.f32 %v1458, %v1467
    %v1470 = vadd.f32 %v1459, %v1467
    %v1471 = vadd.f32 %v1460, %v1467
    %v1472 = vadd.f32 %v1461, %v1467
    %1473 = vst [vmem:[%s6] sm:$0xff] %v1469
    %1474 = vst [vmem:[%s6 + $0x8] sm:$0xff] %v1470
    %s1475 = scalar_lea.vmem %s6, 16
    %1476 = vst [vmem:[%s1475] sm:$0xff] %v1471
    %1477 = vst [vmem:[%s1475 + $0x8] sm:$0xff] %v1472
    // Predicated region
    $region34: #{forward.1} parent=1 // pred_check
      _
    $region35: #{forward.1} parent=1 // pred_check_branch
      %1479 = sbr.rel (0) target = $region37
    $region36: #{forward.1} parent=1 // pred_region
      _
    $region37: #{forward.1} parent=1 // pred_fallthru
      _
    // Predicated region
    $region38: #{forward.1} parent=1 // pred_check
      _
    $region39: #{forward.1} parent=1 // pred_check_branch
      %1481 = sbr.rel (0) target = $region41
    $region40: #{forward.1} parent=1 // pred_region
      _
    $region41: #{forward.1} parent=1 // pred_fallthru
      _
    %1482 = vsyncpa [#allocation5], 1

</llo_original>
